<compile_context>
chip_gen: v7x
topology: tpu7x:2x2x1
jax: 0.10.0
libtpu: 0.0.40
codegen_flags: <defaults>
</compile_context>

<pallas_src>
import functools

import numpy as np
import jax
import jax.numpy as jnp
from jax.experimental import pallas as pl
from jax.experimental.pallas import tpu as pltpu


# ----------------------------------------------------------------------------
# Fused sampling kernel: ONE invocation runs the entire reverse-diffusion loop.
# ----------------------------------------------------------------------------
def sampler_kernel(sched_ref, x_T_ref, w1t_ref, w2cfg_ref, bias_ref, noise_ref,
                   x0_ref, *, start_T):
    """Whole reverse-diffusion chain on resident data.

    sched_ref  : SMEM (T*8,) f32   flat schedule, 8 slots per timestep:
                 [sqrt_recip_ac, sqrt_recipm1_ac, post_mean_c1, post_mean_c2,
                  sqrt(var) (zeroed at t==0), guidance_w (unused, baked into w2cfg), 0, 0]
    x_T_ref    : VMEM (C, B*N)     initial x_T
    w1t_ref    : VMEM (Hd, C)      W1^T of the surrogate eps-model
    w2cfg_ref  : VMEM (C, 2*Hd)    [(1+w)*W2^T, -w*W2^T]  (CFG folded into the weights)
    bias_ref   : VMEM (start_T, 2*Hd, B*N)  stacked [cond; uncond] time+label bias per t
    noise_ref  : VMEM (start_T, C, B*N)     standard-normal noise per t
    x0_ref     : VMEM (C, B*N)     output (written once)
    """
    w1t = w1t_ref[...]            # (Hd, C)   hoisted out of the loop
    w2cfg = w2cfg_ref[...]        # (C, 2*Hd)

    def step(i, x):
        t = start_T - 1 - i                       # time_step: start_T-1 ... 0
        base = t * 8
        c_recip = sched_ref[base + 0]             # sqrt_recip_alphas_cumprod[t]
        c_recipm1 = sched_ref[base + 1]           # sqrt_recipm1_alphas_cumprod[t]
        pm1 = sched_ref[base + 2]                 # posterior_mean_coef1[t]
        pm2 = sched_ref[base + 3]                 # posterior_mean_coef2[t]
        sqrt_var = sched_ref[base + 4]            # sqrt(var[t]); 0 at t == 0

        # Surrogate eps-model (conditional 1x1-conv MLP), cond+uncond branches fused.
        h = jnp.dot(w1t, x, preferred_element_type=jnp.float32)          # (Hd, B*N)
        a = jax.nn.gelu(jnp.concatenate([h, h], axis=0) + bias_ref[t])   # (2*Hd, B*N)
        # One matmul yields the guided eps:  (1+w)*eps_cond - w*eps_uncond.
        eps = jnp.dot(w2cfg, a, preferred_element_type=jnp.float32)      # (C, B*N)

        # _predict_xstart_from_eps + clamp(-1, 1)
        pred_x0 = jnp.clip(c_recip * x - c_recipm1 * eps, -1.0, 1.0)
        # q_posterior_mean_variance
        mean = pm1 * pred_x0 + pm2 * x
        # x_{t-1} = mean + sqrt(var) * noise   (sqrt_var is 0 at t == 0)
        return mean + sqrt_var * noise_ref[t]

    x = jax.lax.fori_loop(0, start_T, step, x_T_ref[...],
                          unroll=True if start_T <= 8 else False)
    # Final clip(x_0, -1, 1), written to HBM exactly once.
    x0_ref[...] = jnp.clip(x, -1.0, 1.0)


# ----------------------------------------------------------------------------
# Jitted wrapper: one compiled program per start_T; a single pallas_call inside.
# ----------------------------------------------------------------------------
@functools.partial(jax.jit, static_argnames=("start_T",))
def _sample(x_T, labels, sched_flat, w1, w2, t_emb, l_emb, w, noise, *, start_T):
    B, C, H, W = x_T.shape
    N = H * W
    Hd = w1.shape[1]

    # NCHW -> (C, B*N): one B<->C transpose, done once in XLA; lane-dense (B*N = 512).
    x_in = jnp.transpose(x_T.astype(jnp.float32).reshape(B, C, N), (1, 0, 2)).reshape(C, B * N)

    # Stacked [cond; uncond] per-timestep embedding bias, broadcast across each batch's
    # lane range once in the wrapper -> (start_T, 2*Hd, B*N), fully resident in VMEM.
    lab_c = l_emb[labels + 1]                                  # (B, Hd)
    lab_u = l_emb[jnp.zeros_like(labels)]                      # (B, Hd)

    def bias_of(lab):
        e = t_emb[:start_T, None, :] + lab[None, :, :]         # (start_T, B, Hd)
        e = jnp.transpose(e, (0, 2, 1))                        # (start_T, Hd, B)
        e = jnp.broadcast_to(e[..., None], (start_T, Hd, B, N))
        return e.reshape(start_T, Hd, B * N)

    bias = jnp.concatenate([bias_of(lab_c), bias_of(lab_u)], axis=1)   # (start_T, 2Hd, B*N)

    w1t = w1.T.astype(jnp.float32)                             # (Hd, C)
    w2t = w2.T.astype(jnp.float32)                             # (C, Hd)
    # Classifier-free guidance baked into the second matmul (w is constant per sampler).
    w2cfg = jnp.concatenate([(1.0 + w) * w2t, (-w) * w2t], axis=1)     # (C, 2*Hd)

    x0 = pl.pallas_call(
        functools.partial(sampler_kernel, start_T=start_T),
        out_shape=jax.ShapeDtypeStruct((C, B * N), jnp.float32),
        in_specs=[
            pl.BlockSpec(memory_space=pltpu.MemorySpace.SMEM),   # schedule table
            pl.BlockSpec(memory_space=pltpu.MemorySpace.VMEM),   # x_T
            pl.BlockSpec(memory_space=pltpu.MemorySpace.VMEM),   # W1^T
            pl.BlockSpec(memory_space=pltpu.MemorySpace.VMEM),   # W2_cfg
            pl.BlockSpec(memory_space=pltpu.MemorySpace.VMEM),   # embedding-bias table
            pl.BlockSpec(memory_space=pltpu.MemorySpace.VMEM),   # noise table
        ],
        out_specs=pl.BlockSpec(memory_space=pltpu.MemorySpace.VMEM),
    )(sched_flat, x_in, w1t, w2cfg, bias, noise)

    # (C, B*N) -> NCHW
    return jnp.transpose(x0.reshape(C, B, N), (1, 0, 2)).reshape(B, C, H, W)


# ----------------------------------------------------------------------------
# GaussianDiffusionSampler (forward pass)
# ----------------------------------------------------------------------------
class GaussianDiffusionSampler:
    def __init__(self, params, beta_1, beta_T, T, w=0.0):
        self.params = params
        self.T = T
        self.w = float(w)

        # Schedule buffers in float64, exactly like the PyTorch __init__.
        betas = np.linspace(beta_1, beta_T, T, dtype=np.float64)
        alphas = 1.0 - betas
        alphas_cumprod = np.cumprod(alphas)
        alphas_cumprod_prev = np.concatenate([[1.0], alphas_cumprod[:-1]])
        self.betas = betas
        self.sqrt_alphas_cumprod = np.sqrt(alphas_cumprod)
        self.sqrt_one_minus_alphas_cumprod = np.sqrt(1.0 - alphas_cumprod)
        # coeff1/coeff2 kept for parity with the reference __init__ (the sampling path
        # goes through pred_x0 + posterior mean, so they are unused here).
        self.coeff1 = np.sqrt(1.0 / alphas)
        self.coeff2 = self.coeff1 * (1.0 - alphas) / np.sqrt(1.0 - alphas_cumprod)
        self.posterior_var = betas * (1.0 - alphas_cumprod_prev) / (1.0 - alphas_cumprod)
        self.sqrt_recip_alphas_cumprod = np.sqrt(1.0 / alphas_cumprod)
        self.sqrt_recipm1_alphas_cumprod = np.sqrt(1.0 / alphas_cumprod - 1.0)
        self.posterior_mean_coef1 = betas * np.sqrt(alphas_cumprod_prev) / (1.0 - alphas_cumprod)
        self.posterior_mean_coef2 = (1.0 - alphas_cumprod_prev) * np.sqrt(alphas) / (1.0 - alphas_cumprod)
        # var = cat([posterior_var[1:2], betas[1:]])
        var_sched = np.concatenate([self.posterior_var[1:2], betas[1:]])

        # Flat (T, 8) coefficient table consumed by the kernel (SMEM).
        sched = np.zeros((T, 8), dtype=np.float64)
        sched[:, 0] = self.sqrt_recip_alphas_cumprod
        sched[:, 1] = self.sqrt_recipm1_alphas_cumprod
        sched[:, 2] = self.posterior_mean_coef1
        sched[:, 3] = self.posterior_mean_coef2
        sched[:, 4] = np.sqrt(var_sched)
        sched[0, 4] = 0.0          # t == 0 adds no noise (reference: `noise = 0`)
        sched[:, 5] = self.w       # guidance scale (kept for parity; baked into w2cfg)
        self.sched_flat = jnp.asarray(sched.reshape(-1), dtype=jnp.float32)

    def forward(self, x_T, labels, start_T, noise_seed=0, zero_noise=False):
        start_T = int(start_T)
        B, C, H, W = x_T.shape
        N = H * W
        # Standard-normal noise, one row per timestep.  Row 0 is irrelevant since
        # sqrt(var)[0] == 0 (t == 0 adds no noise).  Not bit-identical to torch.randn —
        # statistically equivalent.
        if zero_noise:
            noise = jnp.zeros((start_T, C, B * N), jnp.float32)
        else:
            noise = jax.random.normal(jax.random.PRNGKey(int(noise_seed)),
                                      (start_T, C, B * N), jnp.float32)
        return _sample(
            x_T, labels, self.sched_flat,
            self.params["w1"], self.params["w2"],
            self.params["t_emb"], self.params["l_emb"],
            self.w, noise, start_T=start_T,
        )


# ----------------------------------------------------------------------------
# Pure-JAX reference (noise terms forced to 0) for a deterministic check.
# ----------------------------------------------------------------------------
def _reference_forward_nonoise(x_T, labels, params, sched_flat, start_T):
    B, C, H, W = x_T.shape
    sched = np.asarray(sched_flat).reshape(-1, 8)
    x = jnp.asarray(x_T, jnp.float32).reshape(B, C, H * W)
    w1t = params["w1"].T                                       # (Hd, C)
    w2t = params["w2"].T                                       # (C, Hd)
    for t in reversed(range(start_T)):
        emb_c = params["t_emb"][t] + params["l_emb"][labels + 1]              # (B, Hd)
        emb_u = params["t_emb"][t] + params["l_emb"][jnp.zeros_like(labels)]  # (B, Hd)
        h = jnp.einsum("kc,bcn->bkn", w1t, x)
        eps_c = jnp.einsum("ck,bkn->bcn", w2t, jax.nn.gelu(h + emb_c[:, :, None]))
        eps_u = jnp.einsum("ck,bkn->bcn", w2t, jax.nn.gelu(h + emb_u[:, :, None]))
        w = sched[t, 5]
        eps = (1.0 + w) * eps_c - w * eps_u
        pred_x0 = jnp.clip(sched[t, 0] * x - sched[t, 1] * eps, -1.0, 1.0)
        x = sched[t, 2] * pred_x0 + sched[t, 3] * x            # noise term == 0
    return jnp.clip(x, -1.0, 1.0).reshape(B, C, H, W)


# ----------------------------------------------------------------------------
# main
# ----------------------------------------------------------------------------
if __name__ == "__main__":
    B, C, H, W = 2, 4, 16, 16
    HIDDEN = 32
    NUM_CLASSES = 10
    T = 100
    START_T = 4

    key = jax.random.PRNGKey(0)
    k_xT, k_w1, k_w2, k_te, k_le, k_lab = jax.random.split(key, 6)

    # Deterministic synthetic model parameters (UNet surrogate: conditional 1x1-conv MLP).
    params = {
        "w1": (0.02 * jax.random.normal(k_w1, (C, HIDDEN))).astype(jnp.float32),
        "w2": (0.02 * jax.random.normal(k_w2, (HIDDEN, C))).astype(jnp.float32),
        "t_emb": (0.1 * jax.random.normal(k_te, (T, HIDDEN))).astype(jnp.float32),
        "l_emb": (0.1 * jax.random.normal(k_le, (NUM_CLASSES + 1, HIDDEN))).astype(jnp.float32),
    }

    x_T = jax.random.normal(k_xT, (B, C, H, W), jnp.float32)
    labels = jax.random.randint(k_lab, (B,), 0, NUM_CLASSES, dtype=jnp.int32)

    sampler = GaussianDiffusionSampler(params, beta_1=1e-4, beta_T=0.02, T=T, w=0.5)

    # Multi-step deterministic correctness check: noise forced to 0, 3 carried steps,
    # so the fused in-kernel loop must match the pure-JAX reference.
    x0_det = jax.block_until_ready(sampler.forward(x_T, labels, start_T=3, zero_noise=True))
    x0_ref = jax.block_until_ready(
        _reference_forward_nonoise(x_T, labels, params, sampler.sched_flat, 3))
    assert x0_det.shape == (B, C, H, W)
    max_diff = float(jnp.max(jnp.abs(x0_det - x0_ref)))
    assert max_diff < 2e-3, f"deterministic multi-step mismatch: max |diff| = {max_diff}"

    # Full sampling run (START_T steps, Gaussian noise).
    x_0 = jax.block_until_ready(sampler.forward(x_T, labels, start_T=START_T, noise_seed=1234))
    assert x_0.shape == (B, C, H, W)
    assert not bool(jnp.any(jnp.isnan(x_0))), "nan in tensor."
    print("KERNEL_OK")
</pallas_src>

<mosaic_0001>
module attributes {stable_mosaic.version = 11 : i64} {
  func.func @sampler_kernel(%arg0: memref<800xf32, #tpu.memory_space<smem>>, %arg1: memref<4x512xf32, #tpu.memory_space<vmem>>, %arg2: memref<32x4xf32, #tpu.memory_space<vmem>>, %arg3: memref<4x64xf32, #tpu.memory_space<vmem>>, %arg4: memref<3x64x512xf32, #tpu.memory_space<vmem>>, %arg5: memref<3x4x512xf32, #tpu.memory_space<vmem>>, %arg6: memref<4x512xf32, #tpu.memory_space<vmem>>) attributes {dimension_semantics = [], scalar_prefetch = 0 : i64, scratch_operands = 0 : i64, tpu.core_type = #tpu.core_type<tc>} {
    %c0 = arith.constant 0 : index
    %c0_0 = arith.constant 0 : index
    %0 = vector.load %arg2[%c0, %c0_0] : memref<32x4xf32, #tpu.memory_space<vmem>>, vector<32x4xf32>
    %c0_1 = arith.constant 0 : index
    %c0_2 = arith.constant 0 : index
    %1 = vector.load %arg3[%c0_1, %c0_2] : memref<4x64xf32, #tpu.memory_space<vmem>>, vector<4x64xf32>
    %c0_3 = arith.constant 0 : index
    %c0_4 = arith.constant 0 : index
    %2 = vector.load %arg1[%c0_3, %c0_4] : memref<4x512xf32, #tpu.memory_space<vmem>>, vector<4x512xf32>
    %c0_i32 = arith.constant 0 : i32
    %c2_i32 = arith.constant 2 : i32
    %3 = arith.subi %c2_i32, %c0_i32 : i32
    %c8_i32 = arith.constant 8 : i32
    %4 = arith.muli %3, %c8_i32 : i32
    %c0_i32_5 = arith.constant 0 : i32
    %5 = arith.addi %4, %c0_i32_5 : i32
    %6 = arith.index_cast %5 : i32 to index
    %7 = memref.load %arg0[%6] : memref<800xf32, #tpu.memory_space<smem>>
    %c1_i32 = arith.constant 1 : i32
    %8 = arith.addi %4, %c1_i32 : i32
    %9 = arith.index_cast %8 : i32 to index
    %10 = memref.load %arg0[%9] : memref<800xf32, #tpu.memory_space<smem>>
    %c2_i32_6 = arith.constant 2 : i32
    %11 = arith.addi %4, %c2_i32_6 : i32
    %12 = arith.index_cast %11 : i32 to index
    %13 = memref.load %arg0[%12] : memref<800xf32, #tpu.memory_space<smem>>
    %c3_i32 = arith.constant 3 : i32
    %14 = arith.addi %4, %c3_i32 : i32
    %15 = arith.index_cast %14 : i32 to index
    %16 = memref.load %arg0[%15] : memref<800xf32, #tpu.memory_space<smem>>
    %c4_i32 = arith.constant 4 : i32
    %17 = arith.addi %4, %c4_i32 : i32
    %18 = arith.index_cast %17 : i32 to index
    %19 = memref.load %arg0[%18] : memref<800xf32, #tpu.memory_space<smem>>
    %cst = arith.constant dense<0.000000e+00> : vector<32x512xf32>
    %20 = tpu.matmul %0, %2, %cst {dimension_numbers = #tpu.dot_dimension_numbers<[1], [0], [0], [1], [0, 0, 1, 1], [], []>} : vector<32x4xf32>, vector<4x512xf32>, vector<32x512xf32> -> vector<32x512xf32>
    %21 = tpu.concatenate %20, %20 in 0 : vector<32x512xf32>, vector<32x512xf32> -> vector<64x512xf32>
    %22 = arith.index_cast %3 : i32 to index
    %c0_7 = arith.constant 0 : index
    %c0_8 = arith.constant 0 : index
    %23 = vector.load %arg4[%22, %c0_7, %c0_8] : memref<3x64x512xf32, #tpu.memory_space<vmem>>, vector<1x64x512xf32>
    %24 = vector.shape_cast %23 : vector<1x64x512xf32> to vector<64x512xf32>
    %25 = arith.addf %21, %24 : vector<64x512xf32>
    %26 = arith.mulf %25, %25 : vector<64x512xf32>
    %27 = arith.mulf %25, %26 : vector<64x512xf32>
    %cst_9 = arith.constant 4.471500e-02 : f32
    %28 = vector.broadcast %cst_9 : f32 to vector<64x512xf32>
    %29 = arith.mulf %28, %27 : vector<64x512xf32>
    %30 = arith.addf %25, %29 : vector<64x512xf32>
    %cst_10 = arith.constant 0.797884583 : f32
    %31 = vector.broadcast %cst_10 : f32 to vector<64x512xf32>
    %32 = arith.mulf %31, %30 : vector<64x512xf32>
    %33 = math.tanh %32 : vector<64x512xf32>
    %cst_11 = arith.constant 1.000000e+00 : f32
    %34 = vector.broadcast %cst_11 : f32 to vector<64x512xf32>
    %35 = arith.addf %34, %33 : vector<64x512xf32>
    %cst_12 = arith.constant 5.000000e-01 : f32
    %36 = vector.broadcast %cst_12 : f32 to vector<64x512xf32>
    %37 = arith.mulf %36, %35 : vector<64x512xf32>
    %38 = arith.mulf %25, %37 : vector<64x512xf32>
    %cst_13 = arith.constant dense<0.000000e+00> : vector<4x512xf32>
    %39 = tpu.matmul %1, %38, %cst_13 {dimension_numbers = #tpu.dot_dimension_numbers<[1], [0], [0], [1], [0, 0, 1, 1], [], []>} : vector<4x64xf32>, vector<64x512xf32>, vector<4x512xf32> -> vector<4x512xf32>
    %40 = vector.broadcast %7 : f32 to vector<4x512xf32>
    %41 = arith.mulf %40, %2 : vector<4x512xf32>
    %42 = vector.broadcast %10 : f32 to vector<4x512xf32>
    %43 = arith.mulf %42, %39 : vector<4x512xf32>
    %44 = arith.subf %41, %43 : vector<4x512xf32>
    %cst_14 = arith.constant -1.000000e+00 : f32
    %cst_15 = arith.constant 1.000000e+00 : f32
    %45 = vector.broadcast %cst_14 : f32 to vector<4x512xf32>
    %46 = arith.maximumf %45, %44 : vector<4x512xf32>
    %47 = vector.broadcast %cst_15 : f32 to vector<4x512xf32>
    %48 = arith.minimumf %47, %46 : vector<4x512xf32>
    %49 = vector.broadcast %13 : f32 to vector<4x512xf32>
    %50 = arith.mulf %49, %48 : vector<4x512xf32>
    %51 = vector.broadcast %16 : f32 to vector<4x512xf32>
    %52 = arith.mulf %51, %2 : vector<4x512xf32>
    %53 = arith.addf %50, %52 : vector<4x512xf32>
    %54 = arith.index_cast %3 : i32 to index
    %c0_16 = arith.constant 0 : index
    %c0_17 = arith.constant 0 : index
    %55 = vector.load %arg5[%54, %c0_16, %c0_17] : memref<3x4x512xf32, #tpu.memory_space<vmem>>, vector<1x4x512xf32>
    %56 = vector.shape_cast %55 : vector<1x4x512xf32> to vector<4x512xf32>
    %57 = vector.broadcast %19 : f32 to vector<4x512xf32>
    %58 = arith.mulf %57, %56 : vector<4x512xf32>
    %59 = arith.addf %53, %58 : vector<4x512xf32>
    %c1_i32_18 = arith.constant 1 : i32
    %c2_i32_19 = arith.constant 2 : i32
    %60 = arith.subi %c2_i32_19, %c1_i32_18 : i32
    %c8_i32_20 = arith.constant 8 : i32
    %61 = arith.muli %60, %c8_i32_20 : i32
    %c0_i32_21 = arith.constant 0 : i32
    %62 = arith.addi %61, %c0_i32_21 : i32
    %63 = arith.index_cast %62 : i32 to index
    %64 = memref.load %arg0[%63] : memref<800xf32, #tpu.memory_space<smem>>
    %c1_i32_22 = arith.constant 1 : i32
    %65 = arith.addi %61, %c1_i32_22 : i32
    %66 = arith.index_cast %65 : i32 to index
    %67 = memref.load %arg0[%66] : memref<800xf32, #tpu.memory_space<smem>>
    %c2_i32_23 = arith.constant 2 : i32
    %68 = arith.addi %61, %c2_i32_23 : i32
    %69 = arith.index_cast %68 : i32 to index
    %70 = memref.load %arg0[%69] : memref<800xf32, #tpu.memory_space<smem>>
    %c3_i32_24 = arith.constant 3 : i32
    %71 = arith.addi %61, %c3_i32_24 : i32
    %72 = arith.index_cast %71 : i32 to index
    %73 = memref.load %arg0[%72] : memref<800xf32, #tpu.memory_space<smem>>
    %c4_i32_25 = arith.constant 4 : i32
    %74 = arith.addi %61, %c4_i32_25 : i32
    %75 = arith.index_cast %74 : i32 to index
    %76 = memref.load %arg0[%75] : memref<800xf32, #tpu.memory_space<smem>>
    %cst_26 = arith.constant dense<0.000000e+00> : vector<32x512xf32>
    %77 = tpu.matmul %0, %59, %cst_26 {dimension_numbers = #tpu.dot_dimension_numbers<[1], [0], [0], [1], [0, 0, 1, 1], [], []>} : vector<32x4xf32>, vector<4x512xf32>, vector<32x512xf32> -> vector<32x512xf32>
    %78 = tpu.concatenate %77, %77 in 0 : vector<32x512xf32>, vector<32x512xf32> -> vector<64x512xf32>
    %79 = arith.index_cast %60 : i32 to index
    %c0_27 = arith.constant 0 : index
    %c0_28 = arith.constant 0 : index
    %80 = vector.load %arg4[%79, %c0_27, %c0_28] : memref<3x64x512xf32, #tpu.memory_space<vmem>>, vector<1x64x512xf32>
    %81 = vector.shape_cast %80 : vector<1x64x512xf32> to vector<64x512xf32>
    %82 = arith.addf %78, %81 : vector<64x512xf32>
    %83 = arith.mulf %82, %82 : vector<64x512xf32>
    %84 = arith.mulf %82, %83 : vector<64x512xf32>
    %cst_29 = arith.constant 4.471500e-02 : f32
    %85 = vector.broadcast %cst_29 : f32 to vector<64x512xf32>
    %86 = arith.mulf %85, %84 : vector<64x512xf32>
    %87 = arith.addf %82, %86 : vector<64x512xf32>
    %cst_30 = arith.constant 0.797884583 : f32
    %88 = vector.broadcast %cst_30 : f32 to vector<64x512xf32>
    %89 = arith.mulf %88, %87 : vector<64x512xf32>
    %90 = math.tanh %89 : vector<64x512xf32>
    %cst_31 = arith.constant 1.000000e+00 : f32
    %91 = vector.broadcast %cst_31 : f32 to vector<64x512xf32>
    %92 = arith.addf %91, %90 : vector<64x512xf32>
    %cst_32 = arith.constant 5.000000e-01 : f32
    %93 = vector.broadcast %cst_32 : f32 to vector<64x512xf32>
    %94 = arith.mulf %93, %92 : vector<64x512xf32>
    %95 = arith.mulf %82, %94 : vector<64x512xf32>
    %cst_33 = arith.constant dense<0.000000e+00> : vector<4x512xf32>
    %96 = tpu.matmul %1, %95, %cst_33 {dimension_numbers = #tpu.dot_dimension_numbers<[1], [0], [0], [1], [0, 0, 1, 1], [], []>} : vector<4x64xf32>, vector<64x512xf32>, vector<4x512xf32> -> vector<4x512xf32>
    %97 = vector.broadcast %64 : f32 to vector<4x512xf32>
    %98 = arith.mulf %97, %59 : vector<4x512xf32>
    %99 = vector.broadcast %67 : f32 to vector<4x512xf32>
    %100 = arith.mulf %99, %96 : vector<4x512xf32>
    %101 = arith.subf %98, %100 : vector<4x512xf32>
    %cst_34 = arith.constant -1.000000e+00 : f32
    %cst_35 = arith.constant 1.000000e+00 : f32
    %102 = vector.broadcast %cst_34 : f32 to vector<4x512xf32>
    %103 = arith.maximumf %102, %101 : vector<4x512xf32>
    %104 = vector.broadcast %cst_35 : f32 to vector<4x512xf32>
    %105 = arith.minimumf %104, %103 : vector<4x512xf32>
    %106 = vector.broadcast %70 : f32 to vector<4x512xf32>
    %107 = arith.mulf %106, %105 : vector<4x512xf32>
    %108 = vector.broadcast %73 : f32 to vector<4x512xf32>
    %109 = arith.mulf %108, %59 : vector<4x512xf32>
    %110 = arith.addf %107, %109 : vector<4x512xf32>
    %111 = arith.index_cast %60 : i32 to index
    %c0_36 = arith.constant 0 : index
    %c0_37 = arith.constant 0 : index
    %112 = vector.load %arg5[%111, %c0_36, %c0_37] : memref<3x4x512xf32, #tpu.memory_space<vmem>>, vector<1x4x512xf32>
    %113 = vector.shape_cast %112 : vector<1x4x512xf32> to vector<4x512xf32>
    %114 = vector.broadcast %76 : f32 to vector<4x512xf32>
    %115 = arith.mulf %114, %113 : vector<4x512xf32>
    %116 = arith.addf %110, %115 : vector<4x512xf32>
    %c2_i32_38 = arith.constant 2 : i32
    %c2_i32_39 = arith.constant 2 : i32
    %117 = arith.subi %c2_i32_39, %c2_i32_38 : i32
    %c8_i32_40 = arith.constant 8 : i32
    %118 = arith.muli %117, %c8_i32_40 : i32
    %c0_i32_41 = arith.constant 0 : i32
    %119 = arith.addi %118, %c0_i32_41 : i32
    %120 = arith.index_cast %119 : i32 to index
    %121 = memref.load %arg0[%120] : memref<800xf32, #tpu.memory_space<smem>>
    %c1_i32_42 = arith.constant 1 : i32
    %122 = arith.addi %118, %c1_i32_42 : i32
    %123 = arith.index_cast %122 : i32 to index
    %124 = memref.load %arg0[%123] : memref<800xf32, #tpu.memory_space<smem>>
    %c2_i32_43 = arith.constant 2 : i32
    %125 = arith.addi %118, %c2_i32_43 : i32
    %126 = arith.index_cast %125 : i32 to index
    %127 = memref.load %arg0[%126] : memref<800xf32, #tpu.memory_space<smem>>
    %c3_i32_44 = arith.constant 3 : i32
    %128 = arith.addi %118, %c3_i32_44 : i32
    %129 = arith.index_cast %128 : i32 to index
    %130 = memref.load %arg0[%129] : memref<800xf32, #tpu.memory_space<smem>>
    %c4_i32_45 = arith.constant 4 : i32
    %131 = arith.addi %118, %c4_i32_45 : i32
    %132 = arith.index_cast %131 : i32 to index
    %133 = memref.load %arg0[%132] : memref<800xf32, #tpu.memory_space<smem>>
    %cst_46 = arith.constant dense<0.000000e+00> : vector<32x512xf32>
    %134 = tpu.matmul %0, %116, %cst_46 {dimension_numbers = #tpu.dot_dimension_numbers<[1], [0], [0], [1], [0, 0, 1, 1], [], []>} : vector<32x4xf32>, vector<4x512xf32>, vector<32x512xf32> -> vector<32x512xf32>
    %135 = tpu.concatenate %134, %134 in 0 : vector<32x512xf32>, vector<32x512xf32> -> vector<64x512xf32>
    %136 = arith.index_cast %117 : i32 to index
    %c0_47 = arith.constant 0 : index
    %c0_48 = arith.constant 0 : index
    %137 = vector.load %arg4[%136, %c0_47, %c0_48] : memref<3x64x512xf32, #tpu.memory_space<vmem>>, vector<1x64x512xf32>
    %138 = vector.shape_cast %137 : vector<1x64x512xf32> to vector<64x512xf32>
    %139 = arith.addf %135, %138 : vector<64x512xf32>
    %140 = arith.mulf %139, %139 : vector<64x512xf32>
    %141 = arith.mulf %139, %140 : vector<64x512xf32>
    %cst_49 = arith.constant 4.471500e-02 : f32
    %142 = vector.broadcast %cst_49 : f32 to vector<64x512xf32>
    %143 = arith.mulf %142, %141 : vector<64x512xf32>
    %144 = arith.addf %139, %143 : vector<64x512xf32>
    %cst_50 = arith.constant 0.797884583 : f32
    %145 = vector.broadcast %cst_50 : f32 to vector<64x512xf32>
    %146 = arith.mulf %145, %144 : vector<64x512xf32>
    %147 = math.tanh %146 : vector<64x512xf32>
    %cst_51 = arith.constant 1.000000e+00 : f32
    %148 = vector.broadcast %cst_51 : f32 to vector<64x512xf32>
    %149 = arith.addf %148, %147 : vector<64x512xf32>
    %cst_52 = arith.constant 5.000000e-01 : f32
    %150 = vector.broadcast %cst_52 : f32 to vector<64x512xf32>
    %151 = arith.mulf %150, %149 : vector<64x512xf32>
    %152 = arith.mulf %139, %151 : vector<64x512xf32>
    %cst_53 = arith.constant dense<0.000000e+00> : vector<4x512xf32>
    %153 = tpu.matmul %1, %152, %cst_53 {dimension_numbers = #tpu.dot_dimension_numbers<[1], [0], [0], [1], [0, 0, 1, 1], [], []>} : vector<4x64xf32>, vector<64x512xf32>, vector<4x512xf32> -> vector<4x512xf32>
    %154 = vector.broadcast %121 : f32 to vector<4x512xf32>
    %155 = arith.mulf %154, %116 : vector<4x512xf32>
    %156 = vector.broadcast %124 : f32 to vector<4x512xf32>
    %157 = arith.mulf %156, %153 : vector<4x512xf32>
    %158 = arith.subf %155, %157 : vector<4x512xf32>
    %cst_54 = arith.constant -1.000000e+00 : f32
    %cst_55 = arith.constant 1.000000e+00 : f32
    %159 = vector.broadcast %cst_54 : f32 to vector<4x512xf32>
    %160 = arith.maximumf %159, %158 : vector<4x512xf32>
    %161 = vector.broadcast %cst_55 : f32 to vector<4x512xf32>
    %162 = arith.minimumf %161, %160 : vector<4x512xf32>
    %163 = vector.broadcast %127 : f32 to vector<4x512xf32>
    %164 = arith.mulf %163, %162 : vector<4x512xf32>
    %165 = vector.broadcast %130 : f32 to vector<4x512xf32>
    %166 = arith.mulf %165, %116 : vector<4x512xf32>
    %167 = arith.addf %164, %166 : vector<4x512xf32>
    %168 = arith.index_cast %117 : i32 to index
    %c0_56 = arith.constant 0 : index
    %c0_57 = arith.constant 0 : index
    %169 = vector.load %arg5[%168, %c0_56, %c0_57] : memref<3x4x512xf32, #tpu.memory_space<vmem>>, vector<1x4x512xf32>
    %170 = vector.shape_cast %169 : vector<1x4x512xf32> to vector<4x512xf32>
    %171 = vector.broadcast %133 : f32 to vector<4x512xf32>
    %172 = arith.mulf %171, %170 : vector<4x512xf32>
    %173 = arith.addf %167, %172 : vector<4x512xf32>
    %c3_i32_58 = arith.constant 3 : i32
    %cst_59 = arith.constant -1.000000e+00 : f32
    %cst_60 = arith.constant 1.000000e+00 : f32
    %174 = vector.broadcast %cst_59 : f32 to vector<4x512xf32>
    %175 = arith.maximumf %174, %173 : vector<4x512xf32>
    %176 = vector.broadcast %cst_60 : f32 to vector<4x512xf32>
    %177 = arith.minimumf %176, %175 : vector<4x512xf32>
    %c0_61 = arith.constant 0 : index
    %c0_62 = arith.constant 0 : index
    %178 = vector.load %arg6[%c0_61, %c0_62] : memref<4x512xf32, #tpu.memory_space<vmem>>, vector<4x512xf32>
    tpu.vector_store %arg6[%c0_61, %c0_62], %177 {strides = array<i32>} : memref<4x512xf32, #tpu.memory_space<vmem>>, vector<4x512xf32>,
    return
  }
}

</mosaic_0001>

<llo_original>
// kernel: _sample.1
$region0: #{_sample.1}
  #allocation0 [shape = 'u32[]', space=smem, size = 0x4, offset = 0x4, fixed_abs, tag = 'smem constant byte address 0x4 - core index']
  #allocation1 [shape = 'u32[144,128]{1,0:T(1,128)}', space=vmem, size = 0x12000, scoped, tag = 'internal scratch']
  %s0 = inlined_call_operand.vmem [shape: f32[800], index: 0, kind: input, shape index: {}]
  %s1 = inlined_call_operand.vmem [shape: f32[4,512], index: 1, kind: input, shape index: {}]
  %s2 = inlined_call_operand.vmem [shape: f32[32,4], index: 2, kind: input, shape index: {}]
  %s3 = inlined_call_operand.vmem [shape: f32[4,64], index: 3, kind: input, shape index: {}]
  %s4 = inlined_call_operand.vmem [shape: f32[3,64,512], index: 4, kind: input, shape index: {}]
  %s5 = inlined_call_operand.vmem [shape: f32[3,4,512], index: 5, kind: input, shape index: {}]
  %s6 = inlined_call_operand.vmem [shape: f32[4,512], index: 6, kind: output, shape index: {}]
  %s7 = sld [smem:[#allocation0]]
  $region38: #{_sample.1} parent=0
    _
  %s9 = ssub.s32 1, %s7
  %s10 = scalar_select 0, %s9, %s7
  $region1: #{_sample.1} parent=0
    #allocation2 [shape = 'u8[3584]{0}', space=smem, size = 0xe00, scoped, tag = 'input window, operand 0, single buffered']
    #allocation3 [shape = 's32[1]{0}', space=sflag, size = 0x4, scoped, tag = 'scoped memory for _sample.1']
    %11 = vsyncpa [#allocation3], 0
    // Predicated region
    $region2: #{_sample.1} parent=1 // pred_check
      _
    $region3: #{_sample.1} parent=1 // pred_check_branch
      %13 = sbr.rel (0) target = $region5
    $region4: #{_sample.1} parent=1 // pred_region
      %s15 = ssub.s32 112, 112
      %16 = vsyncadd [#allocation3], %s15
      %s18 = sshll.u32 %s0, 4
      %s19 = int_to_ptr.vmem [resolvable:$true] %s18
      %21 = dma.vmem_to_smem %s19, 112, [#allocation2], [#allocation3]
    $region5: #{_sample.1} parent=1 // pred_fallthru
      _
    // Predicated region
    $region6: #{_sample.1} parent=1 // pred_check
      _
    $region7: #{_sample.1} parent=1 // pred_check_branch
      %23 = sbr.rel (0) target = $region9
    $region8: #{_sample.1} parent=1 // pred_region
      _
    $region9: #{_sample.1} parent=1 // pred_fallthru
      _
    // Predicated region
    $region10: #{_sample.1} parent=1 // pred_check
      _
    $region11: #{_sample.1} parent=1 // pred_check_branch
      %25 = sbr.rel (0) target = $region13
    $region12: #{_sample.1} parent=1 // pred_region
      _
    $region13: #{_sample.1} parent=1 // pred_fallthru
      _
    // Predicated region
    $region14: #{_sample.1} parent=1 // pred_check
      _
    $region15: #{_sample.1} parent=1 // pred_check_branch
      %27 = sbr.rel (0) target = $region17
    $region16: #{_sample.1} parent=1 // pred_region
      _
    $region17: #{_sample.1} parent=1 // pred_fallthru
      _
    // Predicated region
    $region18: #{_sample.1} parent=1 // pred_check
      _
    $region19: #{_sample.1} parent=1 // pred_check_branch
      %29 = sbr.rel (0) target = $region21
    $region20: #{_sample.1} parent=1 // pred_region
      _
    $region21: #{_sample.1} parent=1 // pred_fallthru
      _
    // Predicated region
    $region22: #{_sample.1} parent=1 // pred_check
      _
    $region23: #{_sample.1} parent=1 // pred_check_branch
      %31 = sbr.rel (0) target = $region25
    $region24: #{_sample.1} parent=1 // pred_region
      _
    $region25: #{_sample.1} parent=1 // pred_fallthru
      _
    // Predicated region
    $region26: #{_sample.1} parent=1 // pred_check
      _
    $region27: #{_sample.1} parent=1 // pred_check_branch
      %33 = sbr.rel (0) target = $region29
    $region28: #{_sample.1} parent=1 // pred_region
      %34 = dma.done [#allocation3], 112
    $region29: #{_sample.1} parent=1 // pred_fallthru
      _
    %35 = sfence
    %v36 = vld [vmem:[%s2] sm:$0xff]
    %v37 = vld [vmem:[%s2 + $0x8] sm:$0xff]
    %v38 = vld [vmem:[%s2 + $0x10] sm:$0xff]
    %v39 = vld [vmem:[%s2 + $0x18] sm:$0xff]
    %v40 = vld [vmem:[%s3] sm:$0xf]
    %v41 = vld [vmem:[%s1] sm:$0xff]
    %v42 = vld [vmem:[%s1 + $0x8] sm:$0xff]
    %s43 = sld [smem:[#allocation2 + $0x10]]
    %s44 = sld [smem:[#allocation2 + $0x11]]
    %s45 = sld [smem:[#allocation2 + $0x12]]
    %s46 = sld [smem:[#allocation2 + $0x13]]
    %s47 = sld [smem:[#allocation2 + $0x14]]
    %v50 = vcombine.high %v41, %v41
    %v51 = vcombine.high %v42, %v42
    %vm52 = vcmask 31744
    %v54 = vsel %vm52, %v36, 0
    %v57 = vsel %vm52, %v37, 0
    %v60 = vsel %vm52, %v38, 0
    %v63 = vsel %vm52, %v39, 0
    %vm65 = vcmask 1043456
    %v66 = vsel %vm65, %v41, 0
    %v68 = vsel %vm65, %v50, 0
    %v70 = vsel %vm65, %v42, 0
    %v72 = vsel %vm65, %v51, 0
    %74 = vmatprep.subr.mxu0 %v68
    %75 = vmatpush1.msra.mxu0 %v66
    %76 = vmatprep.subr.mxu0 0.0
    %77 = vmatpush1.msra.mxu0 0.0
    %78 = vmatprep.subr.mxu0 0.0
    %79 = vmatpush1.msra.mxu0 0.0
    %80 = vmatprep.subr.mxu0 0.0
    %81 = vmatpush1.msra.mxu0 0.0
    %82 = vmatprep.subr.mxu0 0.0
    %83 = vmatpush1.msra.mxu0 0.0
    %84 = vmatprep.subr.mxu0 0.0
    %85 = vmatpush1.msra.mxu0 0.0
    %86 = vmatprep.subr.mxu0 0.0
    %87 = vmatpush1.msra.mxu0 0.0
    %88 = vmatprep.subr.mxu0 0.0
    %89 = vmatpush1.msra.mxu0 0.0
    %90 = vmatprep.subr.mxu0 0.0
    %91 = vmatpush1.msra.mxu0 0.0
    %92 = vmatprep.subr.mxu0 0.0
    %93 = vmatpush1.msra.mxu0 0.0
    %94 = vmatprep.subr.mxu0 0.0
    %95 = vmatpush1.msra.mxu0 0.0
    %96 = vmatprep.subr.mxu0 0.0
    %97 = vmatpush1.msra.mxu0 0.0
    %98 = vmatprep.subr.mxu0 0.0
    %99 = vmatpush1.msra.mxu0 0.0
    %100 = vmatprep.subr.mxu0 0.0
    %101 = vmatpush1.msra.mxu0 0.0
    %102 = vmatprep.subr.mxu0 0.0
    %103 = vmatpush1.msra.mxu0 0.0
    %104 = vmatprep.subr.mxu0 0.0
    %105 = vmatpush1.msra.mxu0 0.0
    %106 = vmatprep.subr.mxu0 0.0
    %107 = vmatpush1.msra.mxu0 0.0
    %108 = vmatprep.subr.mxu0 0.0
    %109 = vmatpush1.msra.mxu0 0.0
    %110 = vmatprep.subr.mxu0 0.0
    %111 = vmatpush1.msra.mxu0 0.0
    %112 = vmatprep.subr.mxu0 0.0
    %113 = vmatpush1.msra.mxu0 0.0
    %114 = vmatprep.subr.mxu0 0.0
    %115 = vmatpush1.msra.mxu0 0.0
    %116 = vmatprep.subr.mxu0 0.0
    %117 = vmatpush1.msra.mxu0 0.0
    %118 = vmatprep.subr.mxu0 0.0
    %119 = vmatpush1.msra.mxu0 0.0
    %120 = vmatprep.subr.mxu0 0.0
    %121 = vmatpush1.msra.mxu0 0.0
    %122 = vmatprep.subr.mxu0 0.0
    %123 = vmatpush1.msra.mxu0 0.0
    %124 = vmatprep.subr.mxu0 0.0
    %125 = vmatpush1.msra.mxu0 0.0
    %126 = vmatprep.subr.mxu0 0.0
    %127 = vmatpush1.msra.mxu0 0.0
    %128 = vmatprep.subr.mxu0 0.0
    %129 = vmatpush1.msra.mxu0 0.0
    %130 = vmatprep.subr.mxu0 0.0
    %131 = vmatpush1.msra.mxu0 0.0
    %132 = vmatprep.subr.mxu0 0.0
    %133 = vmatpush1.msra.mxu0 0.0
    %134 = vmatprep.subr.mxu0 0.0
    %135 = vmatpush1.msra.mxu0 0.0
    %136 = vmatprep.subr.mxu0 0.0
    %137 = vmatpush1.msra.mxu0 0.0
    %138 = vmatprep.mubr.f32.mxu0 0.0
    %139 = vmatmul.mubr.f32.gmra.mrb[0].mxu0 %v54
    %v140 = vpop.f32.mrb[0].mxu0
    %v141 = vadd.f32 0.0, %v140
    %v142 = vpop.f32.mrb[0].mxu0
    %v143 = vadd.f32 0.0, %v142
    %144 = vmatprep.mubr.f32.mxu0 0.0
    %145 = vmatmul.mubr.f32.gmra.mrb[0].mxu0 %v57
    %v146 = vpop.f32.mrb[0].mxu0
    %v147 = vadd.f32 0.0, %v146
    %v148 = vpop.f32.mrb[0].mxu0
    %v149 = vadd.f32 0.0, %v148
    %150 = vmatprep.mubr.f32.mxu0 0.0
    %151 = vmatmul.mubr.f32.gmra.mrb[0].mxu0 %v60
    %v152 = vpop.f32.mrb[0].mxu0
    %v153 = vadd.f32 0.0, %v152
    %v154 = vpop.f32.mrb[0].mxu0
    %v155 = vadd.f32 0.0, %v154
    %156 = vmatprep.mubr.f32.mxu0 0.0
    %157 = vmatmul.mubr.f32.gmra.mrb[0].mxu0 %v63
    %v158 = vpop.f32.mrb[0].mxu0
    %v159 = vadd.f32 0.0, %v158
    %v160 = vpop.f32.mrb[0].mxu0
    %v161 = vadd.f32 0.0, %v160
    %162 = vdwg.mxu0
    %163 = vmatprep.subr.mxu0 %v72
    %164 = vmatpush1.msra.mxu0 %v70
    %165 = vmatprep.subr.mxu0 0.0
    %166 = vmatpush1.msra.mxu0 0.0
    %167 = vmatprep.subr.mxu0 0.0
    %168 = vmatpush1.msra.mxu0 0.0
    %169 = vmatprep.subr.mxu0 0.0
    %170 = vmatpush1.msra.mxu0 0.0
    %171 = vmatprep.subr.mxu0 0.0
    %172 = vmatpush1.msra.mxu0 0.0
    %173 = vmatprep.subr.mxu0 0.0
    %174 = vmatpush1.msra.mxu0 0.0
    %175 = vmatprep.subr.mxu0 0.0
    %176 = vmatpush1.msra.mxu0 0.0
    %177 = vmatprep.subr.mxu0 0.0
    %178 = vmatpush1.msra.mxu0 0.0
    %179 = vmatprep.subr.mxu0 0.0
    %180 = vmatpush1.msra.mxu0 0.0
    %181 = vmatprep.subr.mxu0 0.0
    %182 = vmatpush1.msra.mxu0 0.0
    %183 = vmatprep.subr.mxu0 0.0
    %184 = vmatpush1.msra.mxu0 0.0
    %185 = vmatprep.subr.mxu0 0.0
    %186 = vmatpush1.msra.mxu0 0.0
    %187 = vmatprep.subr.mxu0 0.0
    %188 = vmatpush1.msra.mxu0 0.0
    %189 = vmatprep.subr.mxu0 0.0
    %190 = vmatpush1.msra.mxu0 0.0
    %191 = vmatprep.subr.mxu0 0.0
    %192 = vmatpush1.msra.mxu0 0.0
    %193 = vmatprep.subr.mxu0 0.0
    %194 = vmatpush1.msra.mxu0 0.0
    %195 = vmatprep.subr.mxu0 0.0
    %196 = vmatpush1.msra.mxu0 0.0
    %197 = vmatprep.subr.mxu0 0.0
    %198 = vmatpush1.msra.mxu0 0.0
    %199 = vmatprep.subr.mxu0 0.0
    %200 = vmatpush1.msra.mxu0 0.0
    %201 = vmatprep.subr.mxu0 0.0
    %202 = vmatpush1.msra.mxu0 0.0
    %203 = vmatprep.subr.mxu0 0.0
    %204 = vmatpush1.msra.mxu0 0.0
    %205 = vmatprep.subr.mxu0 0.0
    %206 = vmatpush1.msra.mxu0 0.0
    %207 = vmatprep.subr.mxu0 0.0
    %208 = vmatpush1.msra.mxu0 0.0
    %209 = vmatprep.subr.mxu0 0.0
    %210 = vmatpush1.msra.mxu0 0.0
    %211 = vmatprep.subr.mxu0 0.0
    %212 = vmatpush1.msra.mxu0 0.0
    %213 = vmatprep.subr.mxu0 0.0
    %214 = vmatpush1.msra.mxu0 0.0
    %215 = vmatprep.subr.mxu0 0.0
    %216 = vmatpush1.msra.mxu0 0.0
    %217 = vmatprep.subr.mxu0 0.0
    %218 = vmatpush1.msra.mxu0 0.0
    %219 = vmatprep.subr.mxu0 0.0
    %220 = vmatpush1.msra.mxu0 0.0
    %221 = vmatprep.subr.mxu0 0.0
    %222 = vmatpush1.msra.mxu0 0.0
    %223 = vmatprep.subr.mxu0 0.0
    %224 = vmatpush1.msra.mxu0 0.0
    %225 = vmatprep.subr.mxu0 0.0
    %226 = vmatpush1.msra.mxu0 0.0
    %227 = vmatprep.mubr.f32.mxu0 0.0
    %228 = vmatmul.mubr.f32.gmra.mrb[0].mxu0 %v54
    %v229 = vpop.f32.mrb[0].mxu0
    %v230 = vadd.f32 0.0, %v229
    %v231 = vpop.f32.mrb[0].mxu0
    %v232 = vadd.f32 0.0, %v231
    %233 = vmatprep.mubr.f32.mxu0 0.0
    %234 = vmatmul.mubr.f32.gmra.mrb[0].mxu0 %v57
    %v235 = vpop.f32.mrb[0].mxu0
    %v236 = vadd.f32 0.0, %v235
    %v237 = vpop.f32.mrb[0].mxu0
    %v238 = vadd.f32 0.0, %v237
    %239 = vmatprep.mubr.f32.mxu0 0.0
    %240 = vmatmul.mubr.f32.gmra.mrb[0].mxu0 %v60
    %v241 = vpop.f32.mrb[0].mxu0
    %v242 = vadd.f32 0.0, %v241
    %v243 = vpop.f32.mrb[0].mxu0
    %v244 = vadd.f32 0.0, %v243
    %245 = vmatprep.mubr.f32.mxu0 0.0
    %246 = vmatmul.mubr.f32.gmra.mrb[0].mxu0 %v63
    %v247 = vpop.f32.mrb[0].mxu0
    %v248 = vadd.f32 0.0, %v247
    %v249 = vpop.f32.mrb[0].mxu0
    %v250 = vadd.f32 0.0, %v249
    %251 = vdwg.mxu0
    %s252 = scalar_lea.vmem %s4, 512
    %v253 = vld [vmem:[%s252] sm:$0xff]
    %v254 = vld [vmem:[%s252 + $0x8] sm:$0xff]
    %v255 = vld [vmem:[%s252 + $0x10] sm:$0xff]
    %v256 = vld [vmem:[%s252 + $0x18] sm:$0xff]
    %v257 = vld [vmem:[%s252 + $0x20] sm:$0xff]
    %v258 = vld [vmem:[%s252 + $0x28] sm:$0xff]
    %v259 = vld [vmem:[%s252 + $0x30] sm:$0xff]
    %v260 = vld [vmem:[%s252 + $0x38] sm:$0xff]
    %v261 = vld [vmem:[%s252 + $0x40] sm:$0xff]
    %v262 = vld [vmem:[%s252 + $0x48] sm:$0xff]
    %v263 = vld [vmem:[%s252 + $0x50] sm:$0xff]
    %v264 = vld [vmem:[%s252 + $0x58] sm:$0xff]
    %v265 = vld [vmem:[%s252 + $0x60] sm:$0xff]
    %v266 = vld [vmem:[%s252 + $0x68] sm:$0xff]
    %v267 = vld [vmem:[%s252 + $0x70] sm:$0xff]
    %v268 = vld [vmem:[%s252 + $0x78] sm:$0xff]
    %v269 = vld [vmem:[%s252 + $0x80] sm:$0xff]
    %v270 = vld [vmem:[%s252 + $0x88] sm:$0xff]
    %v271 = vld [vmem:[%s252 + $0x90] sm:$0xff]
    %v272 = vld [vmem:[%s252 + $0x98] sm:$0xff]
    %v273 = vld [vmem:[%s252 + $0xa0] sm:$0xff]
    %v274 = vld [vmem:[%s252 + $0xa8] sm:$0xff]
    %v275 = vld [vmem:[%s252 + $0xb0] sm:$0xff]
    %v276 = vld [vmem:[%s252 + $0xb8] sm:$0xff]
    %v277 = vld [vmem:[%s252 + $0xc0] sm:$0xff]
    %v278 = vld [vmem:[%s252 + $0xc8] sm:$0xff]
    %v279 = vld [vmem:[%s252 + $0xd0] sm:$0xff]
    %v280 = vld [vmem:[%s252 + $0xd8] sm:$0xff]
    %v281 = vld [vmem:[%s252 + $0xe0] sm:$0xff]
    %v282 = vld [vmem:[%s252 + $0xe8] sm:$0xff]
    %v283 = vld [vmem:[%s252 + $0xf0] sm:$0xff]
    %v284 = vld [vmem:[%s252 + $0xf8] sm:$0xff]
    %v285 = vadd.f32 %v141, %v253
    %v286 = vadd.f32 %v143, %v254
    %v287 = vadd.f32 %v230, %v255
    %v288 = vadd.f32 %v232, %v256
    %v289 = vadd.f32 %v147, %v257
    %v290 = vadd.f32 %v149, %v258
    %v291 = vadd.f32 %v236, %v259
    %v292 = vadd.f32 %v238, %v260
    %v293 = vadd.f32 %v153, %v261
    %v294 = vadd.f32 %v155, %v262
    %v295 = vadd.f32 %v242, %v263
    %v296 = vadd.f32 %v244, %v264
    %v297 = vadd.f32 %v159, %v265
    %v298 = vadd.f32 %v161, %v266
    %v299 = vadd.f32 %v248, %v267
    %v300 = vadd.f32 %v250, %v268
    %v301 = vadd.f32 %v141, %v269
    %v302 = vadd.f32 %v143, %v270
    %v303 = vadd.f32 %v230, %v271
    %v304 = vadd.f32 %v232, %v272
    %v305 = vadd.f32 %v147, %v273
    %v306 = vadd.f32 %v149, %v274
    %v307 = vadd.f32 %v236, %v275
    %v308 = vadd.f32 %v238, %v276
    %v309 = vadd.f32 %v153, %v277
    %v310 = vadd.f32 %v155, %v278
    %v311 = vadd.f32 %v242, %v279
    %v312 = vadd.f32 %v244, %v280
    %v313 = vadd.f32 %v159, %v281
    %v314 = vadd.f32 %v161, %v282
    %v315 = vadd.f32 %v248, %v283
    %v316 = vadd.f32 %v250, %v284
    %v317 = vmul.f32 %v285, %v285
    %v318 = vmul.f32 %v286, %v286
    %v319 = vmul.f32 %v287, %v287
    %v320 = vmul.f32 %v288, %v288
    %v321 = vmul.f32 %v289, %v289
    %v322 = vmul.f32 %v290, %v290
    %v323 = vmul.f32 %v291, %v291
    %v324 = vmul.f32 %v292, %v292
    %v325 = vmul.f32 %v293, %v293
    %v326 = vmul.f32 %v294, %v294
    %v327 = vmul.f32 %v295, %v295
    %v328 = vmul.f32 %v296, %v296
    %v329 = vmul.f32 %v297, %v297
    %v330 = vmul.f32 %v298, %v298
    %v331 = vmul.f32 %v299, %v299
    %v332 = vmul.f32 %v300, %v300
    %v333 = vmul.f32 %v301, %v301
    %v334 = vmul.f32 %v302, %v302
    %v335 = vmul.f32 %v303, %v303
    %v336 = vmul.f32 %v304, %v304
    %v337 = vmul.f32 %v305, %v305
    %v338 = vmul.f32 %v306, %v306
    %v339 = vmul.f32 %v307, %v307
    %v340 = vmul.f32 %v308, %v308
    %v341 = vmul.f32 %v309, %v309
    %v342 = vmul.f32 %v310, %v310
    %v343 = vmul.f32 %v311, %v311
    %v344 = vmul.f32 %v312, %v312
    %v345 = vmul.f32 %v313, %v313
    %v346 = vmul.f32 %v314, %v314
    %v347 = vmul.f32 %v315, %v315
    %v348 = vmul.f32 %v316, %v316
    %v349 = vmul.f32 %v285, %v317
    %v350 = vmul.f32 %v286, %v318
    %v351 = vmul.f32 %v287, %v319
    %v352 = vmul.f32 %v288, %v320
    %v353 = vmul.f32 %v289, %v321
    %v354 = vmul.f32 %v290, %v322
    %v355 = vmul.f32 %v291, %v323
    %v356 = vmul.f32 %v292, %v324
    %v357 = vmul.f32 %v293, %v325
    %v358 = vmul.f32 %v294, %v326
    %v359 = vmul.f32 %v295, %v327
    %v360 = vmul.f32 %v296, %v328
    %v361 = vmul.f32 %v297, %v329
    %v362 = vmul.f32 %v298, %v330
    %v363 = vmul.f32 %v299, %v331
    %v364 = vmul.f32 %v300, %v332
    %v365 = vmul.f32 %v301, %v333
    %v366 = vmul.f32 %v302, %v334
    %v367 = vmul.f32 %v303, %v335
    %v368 = vmul.f32 %v304, %v336
    %v369 = vmul.f32 %v305, %v337
    %v370 = vmul.f32 %v306, %v338
    %v371 = vmul.f32 %v307, %v339
    %v372 = vmul.f32 %v308, %v340
    %v373 = vmul.f32 %v309, %v341
    %v374 = vmul.f32 %v310, %v342
    %v375 = vmul.f32 %v311, %v343
    %v376 = vmul.f32 %v312, %v344
    %v377 = vmul.f32 %v313, %v345
    %v378 = vmul.f32 %v314, %v346
    %v379 = vmul.f32 %v315, %v347
    %v380 = vmul.f32 %v316, %v348
    %v381 = vmul.f32 %v349, 0.044715
    %v382 = vmul.f32 %v350, 0.044715
    %v383 = vmul.f32 %v351, 0.044715
    %v384 = vmul.f32 %v352, 0.044715
    %v385 = vmul.f32 %v353, 0.044715
    %v386 = vmul.f32 %v354, 0.044715
    %v387 = vmul.f32 %v355, 0.044715
    %v388 = vmul.f32 %v356, 0.044715
    %v389 = vmul.f32 %v357, 0.044715
    %v390 = vmul.f32 %v358, 0.044715
    %v391 = vmul.f32 %v359, 0.044715
    %v392 = vmul.f32 %v360, 0.044715
    %v393 = vmul.f32 %v361, 0.044715
    %v394 = vmul.f32 %v362, 0.044715
    %v395 = vmul.f32 %v363, 0.044715
    %v396 = vmul.f32 %v364, 0.044715
    %v397 = vmul.f32 %v365, 0.044715
    %v398 = vmul.f32 %v366, 0.044715
    %v399 = vmul.f32 %v367, 0.044715
    %v400 = vmul.f32 %v368, 0.044715
    %v401 = vmul.f32 %v369, 0.044715
    %v402 = vmul.f32 %v370, 0.044715
    %v403 = vmul.f32 %v371, 0.044715
    %v404 = vmul.f32 %v372, 0.044715
    %v405 = vmul.f32 %v373, 0.044715
    %v406 = vmul.f32 %v374, 0.044715
    %v407 = vmul.f32 %v375, 0.044715
    %v408 = vmul.f32 %v376, 0.044715
    %v409 = vmul.f32 %v377, 0.044715
    %v410 = vmul.f32 %v378, 0.044715
    %v411 = vmul.f32 %v379, 0.044715
    %v412 = vmul.f32 %v380, 0.044715
    %v413 = vadd.f32 %v285, %v381
    %v414 = vadd.f32 %v286, %v382
    %v415 = vadd.f32 %v287, %v383
    %v416 = vadd.f32 %v288, %v384
    %v417 = vadd.f32 %v289, %v385
    %v418 = vadd.f32 %v290, %v386
    %v419 = vadd.f32 %v291, %v387
    %v420 = vadd.f32 %v292, %v388
    %v421 = vadd.f32 %v293, %v389
    %v422 = vadd.f32 %v294, %v390
    %v423 = vadd.f32 %v295, %v391
    %v424 = vadd.f32 %v296, %v392
    %v425 = vadd.f32 %v297, %v393
    %v426 = vadd.f32 %v298, %v394
    %v427 = vadd.f32 %v299, %v395
    %v428 = vadd.f32 %v300, %v396
    %v429 = vadd.f32 %v301, %v397
    %v430 = vadd.f32 %v302, %v398
    %v431 = vadd.f32 %v303, %v399
    %v432 = vadd.f32 %v304, %v400
    %v433 = vadd.f32 %v305, %v401
    %v434 = vadd.f32 %v306, %v402
    %v435 = vadd.f32 %v307, %v403
    %v436 = vadd.f32 %v308, %v404
    %v437 = vadd.f32 %v309, %v405
    %v438 = vadd.f32 %v310, %v406
    %v439 = vadd.f32 %v311, %v407
    %v440 = vadd.f32 %v312, %v408
    %v441 = vadd.f32 %v313, %v409
    %v442 = vadd.f32 %v314, %v410
    %v443 = vadd.f32 %v315, %v411
    %v444 = vadd.f32 %v316, %v412
    %v445 = vmul.f32 %v413, 0.7978846
    %v446 = vmul.f32 %v414, 0.7978846
    %v447 = vmul.f32 %v415, 0.7978846
    %v448 = vmul.f32 %v416, 0.7978846
    %v449 = vmul.f32 %v417, 0.7978846
    %v450 = vmul.f32 %v418, 0.7978846
    %v451 = vmul.f32 %v419, 0.7978846
    %v452 = vmul.f32 %v420, 0.7978846
    %v453 = vmul.f32 %v421, 0.7978846
    %v454 = vmul.f32 %v422, 0.7978846
    %v455 = vmul.f32 %v423, 0.7978846
    %v456 = vmul.f32 %v424, 0.7978846
    %v457 = vmul.f32 %v425, 0.7978846
    %v458 = vmul.f32 %v426, 0.7978846
    %v459 = vmul.f32 %v427, 0.7978846
    %v460 = vmul.f32 %v428, 0.7978846
    %v461 = vmul.f32 %v429, 0.7978846
    %v462 = vmul.f32 %v430, 0.7978846
    %v463 = vmul.f32 %v431, 0.7978846
    %v464 = vmul.f32 %v432, 0.7978846
    %v465 = vmul.f32 %v433, 0.7978846
    %v466 = vmul.f32 %v434, 0.7978846
    %v467 = vmul.f32 %v435, 0.7978846
    %v468 = vmul.f32 %v436, 0.7978846
    %v469 = vmul.f32 %v437, 0.7978846
    %v470 = vmul.f32 %v438, 0.7978846
    %v471 = vmul.f32 %v439, 0.7978846
    %v472 = vmul.f32 %v440, 0.7978846
    %v473 = vmul.f32 %v441, 0.7978846
    %v474 = vmul.f32 %v442, 0.7978846
    %v475 = vmul.f32 %v443, 0.7978846
    %v476 = vmul.f32 %v444, 0.7978846
    %v477 = vtanh.pop %v445
    %v478 = vtanh.pop %v446
    %v479 = vtanh.pop %v447
    %v480 = vtanh.pop %v448
    %v481 = vtanh.pop %v449
    %v482 = vtanh.pop %v450
    %v483 = vtanh.pop %v451
    %v484 = vtanh.pop %v452
    %v485 = vtanh.pop %v453
    %v486 = vtanh.pop %v454
    %v487 = vtanh.pop %v455
    %v488 = vtanh.pop %v456
    %v489 = vtanh.pop %v457
    %v490 = vtanh.pop %v458
    %v491 = vtanh.pop %v459
    %v492 = vtanh.pop %v460
    %v493 = vtanh.pop %v461
    %v494 = vtanh.pop %v462
    %v495 = vtanh.pop %v463
    %v496 = vtanh.pop %v464
    %v497 = vtanh.pop %v465
    %v498 = vtanh.pop %v466
    %v499 = vtanh.pop %v467
    %v500 = vtanh.pop %v468
    %v501 = vtanh.pop %v469
    %v502 = vtanh.pop %v470
    %v503 = vtanh.pop %v471
    %v504 = vtanh.pop %v472
    %v505 = vtanh.pop %v473
    %v506 = vtanh.pop %v474
    %v507 = vtanh.pop %v475
    %v508 = vtanh.pop %v476
    %v509 = vadd.f32 %v477, 1.0
    %v510 = vadd.f32 %v478, 1.0
    %v511 = vadd.f32 %v479, 1.0
    %v512 = vadd.f32 %v480, 1.0
    %v513 = vadd.f32 %v481, 1.0
    %v514 = vadd.f32 %v482, 1.0
    %v515 = vadd.f32 %v483, 1.0
    %v516 = vadd.f32 %v484, 1.0
    %v517 = vadd.f32 %v485, 1.0
    %v518 = vadd.f32 %v486, 1.0
    %v519 = vadd.f32 %v487, 1.0
    %v520 = vadd.f32 %v488, 1.0
    %v521 = vadd.f32 %v489, 1.0
    %v522 = vadd.f32 %v490, 1.0
    %v523 = vadd.f32 %v491, 1.0
    %v524 = vadd.f32 %v492, 1.0
    %v525 = vadd.f32 %v493, 1.0
    %v526 = vadd.f32 %v494, 1.0
    %v527 = vadd.f32 %v495, 1.0
    %v528 = vadd.f32 %v496, 1.0
    %v529 = vadd.f32 %v497, 1.0
    %v530 = vadd.f32 %v498, 1.0
    %v531 = vadd.f32 %v499, 1.0
    %v532 = vadd.f32 %v500, 1.0
    %v533 = vadd.f32 %v501, 1.0
    %v534 = vadd.f32 %v502, 1.0
    %v535 = vadd.f32 %v503, 1.0
    %v536 = vadd.f32 %v504, 1.0
    %v537 = vadd.f32 %v505, 1.0
    %v538 = vadd.f32 %v506, 1.0
    %v539 = vadd.f32 %v507, 1.0
    %v540 = vadd.f32 %v508, 1.0
    %v541 = vmul.f32 %v509, 0.5
    %v542 = vmul.f32 %v510, 0.5
    %v543 = vmul.f32 %v511, 0.5
    %v544 = vmul.f32 %v512, 0.5
    %v545 = vmul.f32 %v513, 0.5
    %v546 = vmul.f32 %v514, 0.5
    %v547 = vmul.f32 %v515, 0.5
    %v548 = vmul.f32 %v516, 0.5
    %v549 = vmul.f32 %v517, 0.5
    %v550 = vmul.f32 %v518, 0.5
    %v551 = vmul.f32 %v519, 0.5
    %v552 = vmul.f32 %v520, 0.5
    %v553 = vmul.f32 %v521, 0.5
    %v554 = vmul.f32 %v522, 0.5
    %v555 = vmul.f32 %v523, 0.5
    %v556 = vmul.f32 %v524, 0.5
    %v557 = vmul.f32 %v525, 0.5
    %v558 = vmul.f32 %v526, 0.5
    %v559 = vmul.f32 %v527, 0.5
    %v560 = vmul.f32 %v528, 0.5
    %v561 = vmul.f32 %v529, 0.5
    %v562 = vmul.f32 %v530, 0.5
    %v563 = vmul.f32 %v531, 0.5
    %v564 = vmul.f32 %v532, 0.5
    %v565 = vmul.f32 %v533, 0.5
    %v566 = vmul.f32 %v534, 0.5
    %v567 = vmul.f32 %v535, 0.5
    %v568 = vmul.f32 %v536, 0.5
    %v569 = vmul.f32 %v537, 0.5
    %v570 = vmul.f32 %v538, 0.5
    %v571 = vmul.f32 %v539, 0.5
    %v572 = vmul.f32 %v540, 0.5
    %v573 = vmul.f32 %v285, %v541
    %v574 = vmul.f32 %v286, %v542
    %v575 = vmul.f32 %v287, %v543
    %v576 = vmul.f32 %v288, %v544
    %v577 = vmul.f32 %v289, %v545
    %v578 = vmul.f32 %v290, %v546
    %v579 = vmul.f32 %v291, %v547
    %v580 = vmul.f32 %v292, %v548
    %v581 = vmul.f32 %v293, %v549
    %v582 = vmul.f32 %v294, %v550
    %v583 = vmul.f32 %v295, %v551
    %v584 = vmul.f32 %v296, %v552
    %v585 = vmul.f32 %v297, %v553
    %v586 = vmul.f32 %v298, %v554
    %v587 = vmul.f32 %v299, %v555
    %v588 = vmul.f32 %v300, %v556
    %v589 = vmul.f32 %v301, %v557
    %v590 = vmul.f32 %v302, %v558
    %v591 = vmul.f32 %v303, %v559
    %v592 = vmul.f32 %v304, %v560
    %v593 = vmul.f32 %v305, %v561
    %v594 = vmul.f32 %v306, %v562
    %v595 = vmul.f32 %v307, %v563
    %v596 = vmul.f32 %v308, %v564
    %v597 = vmul.f32 %v309, %v565
    %v598 = vmul.f32 %v310, %v566
    %v599 = vmul.f32 %v311, %v567
    %v600 = vmul.f32 %v312, %v568
    %v601 = vmul.f32 %v313, %v569
    %v602 = vmul.f32 %v314, %v570
    %v603 = vmul.f32 %v315, %v571
    %v604 = vmul.f32 %v316, %v572
    %vm605 = vcmask 523264
    %v607 = vsel %vm605, %v40, 0
    %609 = vmatprep.subr.mxu0 %v574
    %610 = vmatpush1.msra.mxu0 %v573
    %611 = vmatprep.subr.mxu0 %v578
    %612 = vmatpush1.msra.mxu0 %v577
    %613 = vmatprep.subr.mxu0 %v582
    %614 = vmatpush1.msra.mxu0 %v581
    %615 = vmatprep.subr.mxu0 %v586
    %616 = vmatpush1.msra.mxu0 %v585
    %617 = vmatprep.subr.mxu0 %v590
    %618 = vmatpush1.msra.mxu0 %v589
    %619 = vmatprep.subr.mxu0 %v594
    %620 = vmatpush1.msra.mxu0 %v593
    %621 = vmatprep.subr.mxu0 %v598
    %622 = vmatpush1.msra.mxu0 %v597
    %623 = vmatprep.subr.mxu0 %v602
    %624 = vmatpush1.msra.mxu0 %v601
    %625 = vmatprep.subr.mxu0 0.0
    %626 = vmatpush1.msra.mxu0 0.0
    %627 = vmatprep.subr.mxu0 0.0
    %628 = vmatpush1.msra.mxu0 0.0
    %629 = vmatprep.subr.mxu0 0.0
    %630 = vmatpush1.msra.mxu0 0.0
    %631 = vmatprep.subr.mxu0 0.0
    %632 = vmatpush1.msra.mxu0 0.0
    %633 = vmatprep.subr.mxu0 0.0
    %634 = vmatpush1.msra.mxu0 0.0
    %635 = vmatprep.subr.mxu0 0.0
    %636 = vmatpush1.msra.mxu0 0.0
    %637 = vmatprep.subr.mxu0 0.0
    %638 = vmatpush1.msra.mxu0 0.0
    %639 = vmatprep.subr.mxu0 0.0
    %640 = vmatpush1.msra.mxu0 0.0
    %641 = vmatprep.subr.mxu0 0.0
    %642 = vmatpush1.msra.mxu0 0.0
    %643 = vmatprep.subr.mxu0 0.0
    %644 = vmatpush1.msra.mxu0 0.0
    %645 = vmatprep.subr.mxu0 0.0
    %646 = vmatpush1.msra.mxu0 0.0
    %647 = vmatprep.subr.mxu0 0.0
    %648 = vmatpush1.msra.mxu0 0.0
    %649 = vmatprep.subr.mxu0 0.0
    %650 = vmatpush1.msra.mxu0 0.0
    %651 = vmatprep.subr.mxu0 0.0
    %652 = vmatpush1.msra.mxu0 0.0
    %653 = vmatprep.subr.mxu0 0.0
    %654 = vmatpush1.msra.mxu0 0.0
    %655 = vmatprep.subr.mxu0 0.0
    %656 = vmatpush1.msra.mxu0 0.0
    %657 = vmatprep.subr.mxu0 0.0
    %658 = vmatpush1.msra.mxu0 0.0
    %659 = vmatprep.subr.mxu0 0.0
    %660 = vmatpush1.msra.mxu0 0.0
    %661 = vmatprep.subr.mxu0 0.0
    %662 = vmatpush1.msra.mxu0 0.0
    %663 = vmatprep.subr.mxu0 0.0
    %664 = vmatpush1.msra.mxu0 0.0
    %665 = vmatprep.subr.mxu0 0.0
    %666 = vmatpush1.msra.mxu0 0.0
    %667 = vmatprep.subr.mxu0 0.0
    %668 = vmatpush1.msra.mxu0 0.0
    %669 = vmatprep.subr.mxu0 0.0
    %670 = vmatpush1.msra.mxu0 0.0
    %671 = vmatprep.subr.mxu0 0.0
    %672 = vmatpush1.msra.mxu0 0.0
    %673 = vmatprep.mubr.f32.mxu0 0.0
    %674 = vmatmul.mubr.f32.gmra.mrb[0].mxu0 %v607
    %v675 = vpop.f32.mrb[0].mxu0
    %v676 = vadd.f32 0.0, %v675
    %v677 = vpop.f32.mrb[0].mxu0
    %v678 = vadd.f32 0.0, %v677
    %679 = vdwg.mxu0
    %680 = vmatprep.subr.mxu0 %v576
    %681 = vmatpush1.msra.mxu0 %v575
    %682 = vmatprep.subr.mxu0 %v580
    %683 = vmatpush1.msra.mxu0 %v579
    %684 = vmatprep.subr.mxu0 %v584
    %685 = vmatpush1.msra.mxu0 %v583
    %686 = vmatprep.subr.mxu0 %v588
    %687 = vmatpush1.msra.mxu0 %v587
    %688 = vmatprep.subr.mxu0 %v592
    %689 = vmatpush1.msra.mxu0 %v591
    %690 = vmatprep.subr.mxu0 %v596
    %691 = vmatpush1.msra.mxu0 %v595
    %692 = vmatprep.subr.mxu0 %v600
    %693 = vmatpush1.msra.mxu0 %v599
    %694 = vmatprep.subr.mxu0 %v604
    %695 = vmatpush1.msra.mxu0 %v603
    %696 = vmatprep.subr.mxu0 0.0
    %697 = vmatpush1.msra.mxu0 0.0
    %698 = vmatprep.subr.mxu0 0.0
    %699 = vmatpush1.msra.mxu0 0.0
    %700 = vmatprep.subr.mxu0 0.0
    %701 = vmatpush1.msra.mxu0 0.0
    %702 = vmatprep.subr.mxu0 0.0
    %703 = vmatpush1.msra.mxu0 0.0
    %704 = vmatprep.subr.mxu0 0.0
    %705 = vmatpush1.msra.mxu0 0.0
    %706 = vmatprep.subr.mxu0 0.0
    %707 = vmatpush1.msra.mxu0 0.0
    %708 = vmatprep.subr.mxu0 0.0
    %709 = vmatpush1.msra.mxu0 0.0
    %710 = vmatprep.subr.mxu0 0.0
    %711 = vmatpush1.msra.mxu0 0.0
    %712 = vmatprep.subr.mxu0 0.0
    %713 = vmatpush1.msra.mxu0 0.0
    %714 = vmatprep.subr.mxu0 0.0
    %715 = vmatpush1.msra.mxu0 0.0
    %716 = vmatprep.subr.mxu0 0.0
    %717 = vmatpush1.msra.mxu0 0.0
    %718 = vmatprep.subr.mxu0 0.0
    %719 = vmatpush1.msra.mxu0 0.0
    %720 = vmatprep.subr.mxu0 0.0
    %721 = vmatpush1.msra.mxu0 0.0
    %722 = vmatprep.subr.mxu0 0.0
    %723 = vmatpush1.msra.mxu0 0.0
    %724 = vmatprep.subr.mxu0 0.0
    %725 = vmatpush1.msra.mxu0 0.0
    %726 = vmatprep.subr.mxu0 0.0
    %727 = vmatpush1.msra.mxu0 0.0
    %728 = vmatprep.subr.mxu0 0.0
    %729 = vmatpush1.msra.mxu0 0.0
    %730 = vmatprep.subr.mxu0 0.0
    %731 = vmatpush1.msra.mxu0 0.0
    %732 = vmatprep.subr.mxu0 0.0
    %733 = vmatpush1.msra.mxu0 0.0
    %734 = vmatprep.subr.mxu0 0.0
    %735 = vmatpush1.msra.mxu0 0.0
    %736 = vmatprep.subr.mxu0 0.0
    %737 = vmatpush1.msra.mxu0 0.0
    %738 = vmatprep.subr.mxu0 0.0
    %739 = vmatpush1.msra.mxu0 0.0
    %740 = vmatprep.subr.mxu0 0.0
    %741 = vmatpush1.msra.mxu0 0.0
    %742 = vmatprep.subr.mxu0 0.0
    %743 = vmatpush1.msra.mxu0 0.0
    %744 = vmatprep.mubr.f32.mxu0 0.0
    %745 = vmatmul.mubr.f32.gmra.mrb[0].mxu0 %v607
    %v746 = vpop.f32.mrb[0].mxu0
    %v747 = vadd.f32 0.0, %v746
    %v748 = vpop.f32.mrb[0].mxu0
    %v749 = vadd.f32 0.0, %v748
    %750 = vdwg.mxu0
    %v751 = vstv %s43
    %v752 = vmul.f32 %v751, %v41
    %v753 = vmul.f32 %v751, %v42
    %v754 = vstv %s44
    %v755 = vmul.f32 %v754, %v676
    %v756 = vmul.f32 %v754, %v678
    %v757 = vmul.f32 %v754, %v747
    %v758 = vmul.f32 %v754, %v749
    %v763 = vcombine.low %v755, %v756
    %v764 = vcombine.low %v757, %v758
    %v767 = vsub.f32 %v752, %v763
    %v768 = vsub.f32 %v753, %v764
    %v769 = vmax.f32 %v767, -1.0
    %v770 = vmax.f32 %v768, -1.0
    %v771 = vmin.f32 %v769, 1.0
    %v772 = vmin.f32 %v770, 1.0
    %v773 = vstv %s45
    %v774 = vmul.f32 %v773, %v771
    %v775 = vmul.f32 %v773, %v772
    %v776 = vstv %s46
    %v777 = vmul.f32 %v776, %v41
    %v778 = vmul.f32 %v776, %v42
    %v779 = vadd.f32 %v774, %v777
    %v780 = vadd.f32 %v775, %v778
    %s781 = scalar_lea.vmem %s5, 32
    %v782 = vld [vmem:[%s781] sm:$0xff]
    %v783 = vld [vmem:[%s781 + $0x8] sm:$0xff]
    %v784 = vstv %s47
    %v785 = vmul.f32 %v784, %v782
    %v786 = vmul.f32 %v784, %v783
    %v787 = vadd.f32 %v779, %v785
    %v788 = vadd.f32 %v780, %v786
    %s789 = sld [smem:[#allocation2 + $0x8]]
    %s790 = sld [smem:[#allocation2 + $0x9]]
    %s791 = sld [smem:[#allocation2 + $0xa]]
    %s792 = sld [smem:[#allocation2 + $0xb]]
    %s793 = sld [smem:[#allocation2 + $0xc]]
    %v796 = vcombine.high %v787, %v787
    %v797 = vcombine.high %v788, %v788
    %v798 = vsel %vm65, %v787, 0
    %v800 = vsel %vm65, %v796, 0
    %v802 = vsel %vm65, %v788, 0
    %v804 = vsel %vm65, %v797, 0
    %806 = vmatprep.subr.mxu0 %v800
    %807 = vmatpush1.msra.mxu0 %v798
    %808 = vmatprep.subr.mxu0 0.0
    %809 = vmatpush1.msra.mxu0 0.0
    %810 = vmatprep.subr.mxu0 0.0
    %811 = vmatpush1.msra.mxu0 0.0
    %812 = vmatprep.subr.mxu0 0.0
    %813 = vmatpush1.msra.mxu0 0.0
    %814 = vmatprep.subr.mxu0 0.0
    %815 = vmatpush1.msra.mxu0 0.0
    %816 = vmatprep.subr.mxu0 0.0
    %817 = vmatpush1.msra.mxu0 0.0
    %818 = vmatprep.subr.mxu0 0.0
    %819 = vmatpush1.msra.mxu0 0.0
    %820 = vmatprep.subr.mxu0 0.0
    %821 = vmatpush1.msra.mxu0 0.0
    %822 = vmatprep.subr.mxu0 0.0
    %823 = vmatpush1.msra.mxu0 0.0
    %824 = vmatprep.subr.mxu0 0.0
    %825 = vmatpush1.msra.mxu0 0.0
    %826 = vmatprep.subr.mxu0 0.0
    %827 = vmatpush1.msra.mxu0 0.0
    %828 = vmatprep.subr.mxu0 0.0
    %829 = vmatpush1.msra.mxu0 0.0
    %830 = vmatprep.subr.mxu0 0.0
    %831 = vmatpush1.msra.mxu0 0.0
    %832 = vmatprep.subr.mxu0 0.0
    %833 = vmatpush1.msra.mxu0 0.0
    %834 = vmatprep.subr.mxu0 0.0
    %835 = vmatpush1.msra.mxu0 0.0
    %836 = vmatprep.subr.mxu0 0.0
    %837 = vmatpush1.msra.mxu0 0.0
    %838 = vmatprep.subr.mxu0 0.0
    %839 = vmatpush1.msra.mxu0 0.0
    %840 = vmatprep.subr.mxu0 0.0
    %841 = vmatpush1.msra.mxu0 0.0
    %842 = vmatprep.subr.mxu0 0.0
    %843 = vmatpush1.msra.mxu0 0.0
    %844 = vmatprep.subr.mxu0 0.0
    %845 = vmatpush1.msra.mxu0 0.0
    %846 = vmatprep.subr.mxu0 0.0
    %847 = vmatpush1.msra.mxu0 0.0
    %848 = vmatprep.subr.mxu0 0.0
    %849 = vmatpush1.msra.mxu0 0.0
    %850 = vmatprep.subr.mxu0 0.0
    %851 = vmatpush1.msra.mxu0 0.0
    %852 = vmatprep.subr.mxu0 0.0
    %853 = vmatpush1.msra.mxu0 0.0
    %854 = vmatprep.subr.mxu0 0.0
    %855 = vmatpush1.msra.mxu0 0.0
    %856 = vmatprep.subr.mxu0 0.0
    %857 = vmatpush1.msra.mxu0 0.0
    %858 = vmatprep.subr.mxu0 0.0
    %859 = vmatpush1.msra.mxu0 0.0
    %860 = vmatprep.subr.mxu0 0.0
    %861 = vmatpush1.msra.mxu0 0.0
    %862 = vmatprep.subr.mxu0 0.0
    %863 = vmatpush1.msra.mxu0 0.0
    %864 = vmatprep.subr.mxu0 0.0
    %865 = vmatpush1.msra.mxu0 0.0
    %866 = vmatprep.subr.mxu0 0.0
    %867 = vmatpush1.msra.mxu0 0.0
    %868 = vmatprep.subr.mxu0 0.0
    %869 = vmatpush1.msra.mxu0 0.0
    %870 = vmatprep.mubr.f32.mxu0 0.0
    %871 = vmatmul.mubr.f32.gmra.mrb[0].mxu0 %v54
    %v872 = vpop.f32.mrb[0].mxu0
    %v873 = vadd.f32 0.0, %v872
    %v874 = vpop.f32.mrb[0].mxu0
    %v875 = vadd.f32 0.0, %v874
    %876 = vmatprep.mubr.f32.mxu0 0.0
    %877 = vmatmul.mubr.f32.gmra.mrb[0].mxu0 %v57
    %v878 = vpop.f32.mrb[0].mxu0
    %v879 = vadd.f32 0.0, %v878
    %v880 = vpop.f32.mrb[0].mxu0
    %v881 = vadd.f32 0.0, %v880
    %882 = vmatprep.mubr.f32.mxu0 0.0
    %883 = vmatmul.mubr.f32.gmra.mrb[0].mxu0 %v60
    %v884 = vpop.f32.mrb[0].mxu0
    %v885 = vadd.f32 0.0, %v884
    %v886 = vpop.f32.mrb[0].mxu0
    %v887 = vadd.f32 0.0, %v886
    %888 = vmatprep.mubr.f32.mxu0 0.0
    %889 = vmatmul.mubr.f32.gmra.mrb[0].mxu0 %v63
    %v890 = vpop.f32.mrb[0].mxu0
    %v891 = vadd.f32 0.0, %v890
    %v892 = vpop.f32.mrb[0].mxu0
    %v893 = vadd.f32 0.0, %v892
    %894 = vdwg.mxu0
    %895 = vmatprep.subr.mxu0 %v804
    %896 = vmatpush1.msra.mxu0 %v802
    %897 = vmatprep.subr.mxu0 0.0
    %898 = vmatpush1.msra.mxu0 0.0
    %899 = vmatprep.subr.mxu0 0.0
    %900 = vmatpush1.msra.mxu0 0.0
    %901 = vmatprep.subr.mxu0 0.0
    %902 = vmatpush1.msra.mxu0 0.0
    %903 = vmatprep.subr.mxu0 0.0
    %904 = vmatpush1.msra.mxu0 0.0
    %905 = vmatprep.subr.mxu0 0.0
    %906 = vmatpush1.msra.mxu0 0.0
    %907 = vmatprep.subr.mxu0 0.0
    %908 = vmatpush1.msra.mxu0 0.0
    %909 = vmatprep.subr.mxu0 0.0
    %910 = vmatpush1.msra.mxu0 0.0
    %911 = vmatprep.subr.mxu0 0.0
    %912 = vmatpush1.msra.mxu0 0.0
    %913 = vmatprep.subr.mxu0 0.0
    %914 = vmatpush1.msra.mxu0 0.0
    %915 = vmatprep.subr.mxu0 0.0
    %916 = vmatpush1.msra.mxu0 0.0
    %917 = vmatprep.subr.mxu0 0.0
    %918 = vmatpush1.msra.mxu0 0.0
    %919 = vmatprep.subr.mxu0 0.0
    %920 = vmatpush1.msra.mxu0 0.0
    %921 = vmatprep.subr.mxu0 0.0
    %922 = vmatpush1.msra.mxu0 0.0
    %923 = vmatprep.subr.mxu0 0.0
    %924 = vmatpush1.msra.mxu0 0.0
    %925 = vmatprep.subr.mxu0 0.0
    %926 = vmatpush1.msra.mxu0 0.0
    %927 = vmatprep.subr.mxu0 0.0
    %928 = vmatpush1.msra.mxu0 0.0
    %929 = vmatprep.subr.mxu0 0.0
    %930 = vmatpush1.msra.mxu0 0.0
    %931 = vmatprep.subr.mxu0 0.0
    %932 = vmatpush1.msra.mxu0 0.0
    %933 = vmatprep.subr.mxu0 0.0
    %934 = vmatpush1.msra.mxu0 0.0
    %935 = vmatprep.subr.mxu0 0.0
    %936 = vmatpush1.msra.mxu0 0.0
    %937 = vmatprep.subr.mxu0 0.0
    %938 = vmatpush1.msra.mxu0 0.0
    %939 = vmatprep.subr.mxu0 0.0
    %940 = vmatpush1.msra.mxu0 0.0
    %941 = vmatprep.subr.mxu0 0.0
    %942 = vmatpush1.msra.mxu0 0.0
    %943 = vmatprep.subr.mxu0 0.0
    %944 = vmatpush1.msra.mxu0 0.0
    %945 = vmatprep.subr.mxu0 0.0
    %946 = vmatpush1.msra.mxu0 0.0
    %947 = vmatprep.subr.mxu0 0.0
    %948 = vmatpush1.msra.mxu0 0.0
    %949 = vmatprep.subr.mxu0 0.0
    %950 = vmatpush1.msra.mxu0 0.0
    %951 = vmatprep.subr.mxu0 0.0
    %952 = vmatpush1.msra.mxu0 0.0
    %953 = vmatprep.subr.mxu0 0.0
    %954 = vmatpush1.msra.mxu0 0.0
    %955 = vmatprep.subr.mxu0 0.0
    %956 = vmatpush1.msra.mxu0 0.0
    %957 = vmatprep.subr.mxu0 0.0
    %958 = vmatpush1.msra.mxu0 0.0
    %959 = vmatprep.mubr.f32.mxu0 0.0
    %960 = vmatmul.mubr.f32.gmra.mrb[0].mxu0 %v54
    %v961 = vpop.f32.mrb[0].mxu0
    %v962 = vadd.f32 0.0, %v961
    %v963 = vpop.f32.mrb[0].mxu0
    %v964 = vadd.f32 0.0, %v963
    %965 = vmatprep.mubr.f32.mxu0 0.0
    %966 = vmatmul.mubr.f32.gmra.mrb[0].mxu0 %v57
    %v967 = vpop.f32.mrb[0].mxu0
    %v968 = vadd.f32 0.0, %v967
    %v969 = vpop.f32.mrb[0].mxu0
    %v970 = vadd.f32 0.0, %v969
    %971 = vmatprep.mubr.f32.mxu0 0.0
    %972 = vmatmul.mubr.f32.gmra.mrb[0].mxu0 %v60
    %v973 = vpop.f32.mrb[0].mxu0
    %v974 = vadd.f32 0.0, %v973
    %v975 = vpop.f32.mrb[0].mxu0
    %v976 = vadd.f32 0.0, %v975
    %977 = vmatprep.mubr.f32.mxu0 0.0
    %978 = vmatmul.mubr.f32.gmra.mrb[0].mxu0 %v63
    %v979 = vpop.f32.mrb[0].mxu0
    %v980 = vadd.f32 0.0, %v979
    %v981 = vpop.f32.mrb[0].mxu0
    %v982 = vadd.f32 0.0, %v981
    %983 = vdwg.mxu0
    %s984 = scalar_lea.vmem %s4, 256
    %v985 = vld [vmem:[%s984] sm:$0xff]
    %v986 = vld [vmem:[%s984 + $0x8] sm:$0xff]
    %v987 = vld [vmem:[%s984 + $0x10] sm:$0xff]
    %v988 = vld [vmem:[%s984 + $0x18] sm:$0xff]
    %v989 = vld [vmem:[%s984 + $0x20] sm:$0xff]
    %v990 = vld [vmem:[%s984 + $0x28] sm:$0xff]
    %v991 = vld [vmem:[%s984 + $0x30] sm:$0xff]
    %v992 = vld [vmem:[%s984 + $0x38] sm:$0xff]
    %v993 = vld [vmem:[%s984 + $0x40] sm:$0xff]
    %v994 = vld [vmem:[%s984 + $0x48] sm:$0xff]
    %v995 = vld [vmem:[%s984 + $0x50] sm:$0xff]
    %v996 = vld [vmem:[%s984 + $0x58] sm:$0xff]
    %v997 = vld [vmem:[%s984 + $0x60] sm:$0xff]
    %v998 = vld [vmem:[%s984 + $0x68] sm:$0xff]
    %v999 = vld [vmem:[%s984 + $0x70] sm:$0xff]
    %v1000 = vld [vmem:[%s984 + $0x78] sm:$0xff]
    %v1001 = vld [vmem:[%s984 + $0x80] sm:$0xff]
    %v1002 = vld [vmem:[%s984 + $0x88] sm:$0xff]
    %v1003 = vld [vmem:[%s984 + $0x90] sm:$0xff]
    %v1004 = vld [vmem:[%s984 + $0x98] sm:$0xff]
    %v1005 = vld [vmem:[%s984 + $0xa0] sm:$0xff]
    %v1006 = vld [vmem:[%s984 + $0xa8] sm:$0xff]
    %v1007 = vld [vmem:[%s984 + $0xb0] sm:$0xff]
    %v1008 = vld [vmem:[%s984 + $0xb8] sm:$0xff]
    %v1009 = vld [vmem:[%s984 + $0xc0] sm:$0xff]
    %v1010 = vld [vmem:[%s984 + $0xc8] sm:$0xff]
    %v1011 = vld [vmem:[%s984 + $0xd0] sm:$0xff]
    %v1012 = vld [vmem:[%s984 + $0xd8] sm:$0xff]
    %v1013 = vld [vmem:[%s984 + $0xe0] sm:$0xff]
    %v1014 = vld [vmem:[%s984 + $0xe8] sm:$0xff]
    %v1015 = vld [vmem:[%s984 + $0xf0] sm:$0xff]
    %v1016 = vld [vmem:[%s984 + $0xf8] sm:$0xff]
    %v1017 = vadd.f32 %v873, %v985
    %v1018 = vadd.f32 %v875, %v986
    %v1019 = vadd.f32 %v962, %v987
    %v1020 = vadd.f32 %v964, %v988
    %v1021 = vadd.f32 %v879, %v989
    %v1022 = vadd.f32 %v881, %v990
    %v1023 = vadd.f32 %v968, %v991
    %v1024 = vadd.f32 %v970, %v992
    %v1025 = vadd.f32 %v885, %v993
    %v1026 = vadd.f32 %v887, %v994
    %v1027 = vadd.f32 %v974, %v995
    %v1028 = vadd.f32 %v976, %v996
    %v1029 = vadd.f32 %v891, %v997
    %v1030 = vadd.f32 %v893, %v998
    %v1031 = vadd.f32 %v980, %v999
    %v1032 = vadd.f32 %v982, %v1000
    %v1033 = vadd.f32 %v873, %v1001
    %v1034 = vadd.f32 %v875, %v1002
    %v1035 = vadd.f32 %v962, %v1003
    %v1036 = vadd.f32 %v964, %v1004
    %v1037 = vadd.f32 %v879, %v1005
    %v1038 = vadd.f32 %v881, %v1006
    %v1039 = vadd.f32 %v968, %v1007
    %v1040 = vadd.f32 %v970, %v1008
    %v1041 = vadd.f32 %v885, %v1009
    %v1042 = vadd.f32 %v887, %v1010
    %v1043 = vadd.f32 %v974, %v1011
    %v1044 = vadd.f32 %v976, %v1012
    %v1045 = vadd.f32 %v891, %v1013
    %v1046 = vadd.f32 %v893, %v1014
    %v1047 = vadd.f32 %v980, %v1015
    %v1048 = vadd.f32 %v982, %v1016
    %v1049 = vmul.f32 %v1017, %v1017
    %v1050 = vmul.f32 %v1018, %v1018
    %v1051 = vmul.f32 %v1019, %v1019
    %v1052 = vmul.f32 %v1020, %v1020
    %v1053 = vmul.f32 %v1021, %v1021
    %v1054 = vmul.f32 %v1022, %v1022
    %v1055 = vmul.f32 %v1023, %v1023
    %v1056 = vmul.f32 %v1024, %v1024
    %v1057 = vmul.f32 %v1025, %v1025
    %v1058 = vmul.f32 %v1026, %v1026
    %v1059 = vmul.f32 %v1027, %v1027
    %v1060 = vmul.f32 %v1028, %v1028
    %v1061 = vmul.f32 %v1029, %v1029
    %v1062 = vmul.f32 %v1030, %v1030
    %v1063 = vmul.f32 %v1031, %v1031
    %v1064 = vmul.f32 %v1032, %v1032
    %v1065 = vmul.f32 %v1033, %v1033
    %v1066 = vmul.f32 %v1034, %v1034
    %v1067 = vmul.f32 %v1035, %v1035
    %v1068 = vmul.f32 %v1036, %v1036
    %v1069 = vmul.f32 %v1037, %v1037
    %v1070 = vmul.f32 %v1038, %v1038
    %v1071 = vmul.f32 %v1039, %v1039
    %v1072 = vmul.f32 %v1040, %v1040
    %v1073 = vmul.f32 %v1041, %v1041
    %v1074 = vmul.f32 %v1042, %v1042
    %v1075 = vmul.f32 %v1043, %v1043
    %v1076 = vmul.f32 %v1044, %v1044
    %v1077 = vmul.f32 %v1045, %v1045
    %v1078 = vmul.f32 %v1046, %v1046
    %v1079 = vmul.f32 %v1047, %v1047
    %v1080 = vmul.f32 %v1048, %v1048
    %v1081 = vmul.f32 %v1017, %v1049
    %v1082 = vmul.f32 %v1018, %v1050
    %v1083 = vmul.f32 %v1019, %v1051
    %v1084 = vmul.f32 %v1020, %v1052
    %v1085 = vmul.f32 %v1021, %v1053
    %v1086 = vmul.f32 %v1022, %v1054
    %v1087 = vmul.f32 %v1023, %v1055
    %v1088 = vmul.f32 %v1024, %v1056
    %v1089 = vmul.f32 %v1025, %v1057
    %v1090 = vmul.f32 %v1026, %v1058
    %v1091 = vmul.f32 %v1027, %v1059
    %v1092 = vmul.f32 %v1028, %v1060
    %v1093 = vmul.f32 %v1029, %v1061
    %v1094 = vmul.f32 %v1030, %v1062
    %v1095 = vmul.f32 %v1031, %v1063
    %v1096 = vmul.f32 %v1032, %v1064
    %v1097 = vmul.f32 %v1033, %v1065
    %v1098 = vmul.f32 %v1034, %v1066
    %v1099 = vmul.f32 %v1035, %v1067
    %v1100 = vmul.f32 %v1036, %v1068
    %v1101 = vmul.f32 %v1037, %v1069
    %v1102 = vmul.f32 %v1038, %v1070
    %v1103 = vmul.f32 %v1039, %v1071
    %v1104 = vmul.f32 %v1040, %v1072
    %v1105 = vmul.f32 %v1041, %v1073
    %v1106 = vmul.f32 %v1042, %v1074
    %v1107 = vmul.f32 %v1043, %v1075
    %v1108 = vmul.f32 %v1044, %v1076
    %v1109 = vmul.f32 %v1045, %v1077
    %v1110 = vmul.f32 %v1046, %v1078
    %v1111 = vmul.f32 %v1047, %v1079
    %v1112 = vmul.f32 %v1048, %v1080
    %v1113 = vmul.f32 %v1081, 0.044715
    %v1114 = vmul.f32 %v1082, 0.044715
    %v1115 = vmul.f32 %v1083, 0.044715
    %v1116 = vmul.f32 %v1084, 0.044715
    %v1117 = vmul.f32 %v1085, 0.044715
    %v1118 = vmul.f32 %v1086, 0.044715
    %v1119 = vmul.f32 %v1087, 0.044715
    %v1120 = vmul.f32 %v1088, 0.044715
    %v1121 = vmul.f32 %v1089, 0.044715
    %v1122 = vmul.f32 %v1090, 0.044715
    %v1123 = vmul.f32 %v1091, 0.044715
    %v1124 = vmul.f32 %v1092, 0.044715
    %v1125 = vmul.f32 %v1093, 0.044715
    %v1126 = vmul.f32 %v1094, 0.044715
    %v1127 = vmul.f32 %v1095, 0.044715
    %v1128 = vmul.f32 %v1096, 0.044715
    %v1129 = vmul.f32 %v1097, 0.044715
    %v1130 = vmul.f32 %v1098, 0.044715
    %v1131 = vmul.f32 %v1099, 0.044715
    %v1132 = vmul.f32 %v1100, 0.044715
    %v1133 = vmul.f32 %v1101, 0.044715
    %v1134 = vmul.f32 %v1102, 0.044715
    %v1135 = vmul.f32 %v1103, 0.044715
    %v1136 = vmul.f32 %v1104, 0.044715
    %v1137 = vmul.f32 %v1105, 0.044715
    %v1138 = vmul.f32 %v1106, 0.044715
    %v1139 = vmul.f32 %v1107, 0.044715
    %v1140 = vmul.f32 %v1108, 0.044715
    %v1141 = vmul.f32 %v1109, 0.044715
    %v1142 = vmul.f32 %v1110, 0.044715
    %v1143 = vmul.f32 %v1111, 0.044715
    %v1144 = vmul.f32 %v1112, 0.044715
    %v1145 = vadd.f32 %v1017, %v1113
    %v1146 = vadd.f32 %v1018, %v1114
    %v1147 = vadd.f32 %v1019, %v1115
    %v1148 = vadd.f32 %v1020, %v1116
    %v1149 = vadd.f32 %v1021, %v1117
    %v1150 = vadd.f32 %v1022, %v1118
    %v1151 = vadd.f32 %v1023, %v1119
    %v1152 = vadd.f32 %v1024, %v1120
    %v1153 = vadd.f32 %v1025, %v1121
    %v1154 = vadd.f32 %v1026, %v1122
    %v1155 = vadd.f32 %v1027, %v1123
    %v1156 = vadd.f32 %v1028, %v1124
    %v1157 = vadd.f32 %v1029, %v1125
    %v1158 = vadd.f32 %v1030, %v1126
    %v1159 = vadd.f32 %v1031, %v1127
    %v1160 = vadd.f32 %v1032, %v1128
    %v1161 = vadd.f32 %v1033, %v1129
    %v1162 = vadd.f32 %v1034, %v1130
    %v1163 = vadd.f32 %v1035, %v1131
    %v1164 = vadd.f32 %v1036, %v1132
    %v1165 = vadd.f32 %v1037, %v1133
    %v1166 = vadd.f32 %v1038, %v1134
    %v1167 = vadd.f32 %v1039, %v1135
    %v1168 = vadd.f32 %v1040, %v1136
    %v1169 = vadd.f32 %v1041, %v1137
    %v1170 = vadd.f32 %v1042, %v1138
    %v1171 = vadd.f32 %v1043, %v1139
    %v1172 = vadd.f32 %v1044, %v1140
    %v1173 = vadd.f32 %v1045, %v1141
    %v1174 = vadd.f32 %v1046, %v1142
    %v1175 = vadd.f32 %v1047, %v1143
    %v1176 = vadd.f32 %v1048, %v1144
    %v1177 = vmul.f32 %v1145, 0.7978846
    %v1178 = vmul.f32 %v1146, 0.7978846
    %v1179 = vmul.f32 %v1147, 0.7978846
    %v1180 = vmul.f32 %v1148, 0.7978846
    %v1181 = vmul.f32 %v1149, 0.7978846
    %v1182 = vmul.f32 %v1150, 0.7978846
    %v1183 = vmul.f32 %v1151, 0.7978846
    %v1184 = vmul.f32 %v1152, 0.7978846
    %v1185 = vmul.f32 %v1153, 0.7978846
    %v1186 = vmul.f32 %v1154, 0.7978846
    %v1187 = vmul.f32 %v1155, 0.7978846
    %v1188 = vmul.f32 %v1156, 0.7978846
    %v1189 = vmul.f32 %v1157, 0.7978846
    %v1190 = vmul.f32 %v1158, 0.7978846
    %v1191 = vmul.f32 %v1159, 0.7978846
    %v1192 = vmul.f32 %v1160, 0.7978846
    %v1193 = vmul.f32 %v1161, 0.7978846
    %v1194 = vmul.f32 %v1162, 0.7978846
    %v1195 = vmul.f32 %v1163, 0.7978846
    %v1196 = vmul.f32 %v1164, 0.7978846
    %v1197 = vmul.f32 %v1165, 0.7978846
    %v1198 = vmul.f32 %v1166, 0.7978846
    %v1199 = vmul.f32 %v1167, 0.7978846
    %v1200 = vmul.f32 %v1168, 0.7978846
    %v1201 = vmul.f32 %v1169, 0.7978846
    %v1202 = vmul.f32 %v1170, 0.7978846
    %v1203 = vmul.f32 %v1171, 0.7978846
    %v1204 = vmul.f32 %v1172, 0.7978846
    %v1205 = vmul.f32 %v1173, 0.7978846
    %v1206 = vmul.f32 %v1174, 0.7978846
    %v1207 = vmul.f32 %v1175, 0.7978846
    %v1208 = vmul.f32 %v1176, 0.7978846
    %v1209 = vtanh.pop %v1177
    %v1210 = vtanh.pop %v1178
    %v1211 = vtanh.pop %v1179
    %v1212 = vtanh.pop %v1180
    %v1213 = vtanh.pop %v1181
    %v1214 = vtanh.pop %v1182
    %v1215 = vtanh.pop %v1183
    %v1216 = vtanh.pop %v1184
    %v1217 = vtanh.pop %v1185
    %v1218 = vtanh.pop %v1186
    %v1219 = vtanh.pop %v1187
    %v1220 = vtanh.pop %v1188
    %v1221 = vtanh.pop %v1189
    %v1222 = vtanh.pop %v1190
    %v1223 = vtanh.pop %v1191
    %v1224 = vtanh.pop %v1192
    %v1225 = vtanh.pop %v1193
    %v1226 = vtanh.pop %v1194
    %v1227 = vtanh.pop %v1195
    %v1228 = vtanh.pop %v1196
    %v1229 = vtanh.pop %v1197
    %v1230 = vtanh.pop %v1198
    %v1231 = vtanh.pop %v1199
    %v1232 = vtanh.pop %v1200
    %v1233 = vtanh.pop %v1201
    %v1234 = vtanh.pop %v1202
    %v1235 = vtanh.pop %v1203
    %v1236 = vtanh.pop %v1204
    %v1237 = vtanh.pop %v1205
    %v1238 = vtanh.pop %v1206
    %v1239 = vtanh.pop %v1207
    %v1240 = vtanh.pop %v1208
    %v1241 = vadd.f32 %v1209, 1.0
    %v1242 = vadd.f32 %v1210, 1.0
    %v1243 = vadd.f32 %v1211, 1.0
    %v1244 = vadd.f32 %v1212, 1.0
    %v1245 = vadd.f32 %v1213, 1.0
    %v1246 = vadd.f32 %v1214, 1.0
    %v1247 = vadd.f32 %v1215, 1.0
    %v1248 = vadd.f32 %v1216, 1.0
    %v1249 = vadd.f32 %v1217, 1.0
    %v1250 = vadd.f32 %v1218, 1.0
    %v1251 = vadd.f32 %v1219, 1.0
    %v1252 = vadd.f32 %v1220, 1.0
    %v1253 = vadd.f32 %v1221, 1.0
    %v1254 = vadd.f32 %v1222, 1.0
    %v1255 = vadd.f32 %v1223, 1.0
    %v1256 = vadd.f32 %v1224, 1.0
    %v1257 = vadd.f32 %v1225, 1.0
    %v1258 = vadd.f32 %v1226, 1.0
    %v1259 = vadd.f32 %v1227, 1.0
    %v1260 = vadd.f32 %v1228, 1.0
    %v1261 = vadd.f32 %v1229, 1.0
    %v1262 = vadd.f32 %v1230, 1.0
    %v1263 = vadd.f32 %v1231, 1.0
    %v1264 = vadd.f32 %v1232, 1.0
    %v1265 = vadd.f32 %v1233, 1.0
    %v1266 = vadd.f32 %v1234, 1.0
    %v1267 = vadd.f32 %v1235, 1.0
    %v1268 = vadd.f32 %v1236, 1.0
    %v1269 = vadd.f32 %v1237, 1.0
    %v1270 = vadd.f32 %v1238, 1.0
    %v1271 = vadd.f32 %v1239, 1.0
    %v1272 = vadd.f32 %v1240, 1.0
    %v1273 = vmul.f32 %v1241, 0.5
    %v1274 = vmul.f32 %v1242, 0.5
    %v1275 = vmul.f32 %v1243, 0.5
    %v1276 = vmul.f32 %v1244, 0.5
    %v1277 = vmul.f32 %v1245, 0.5
    %v1278 = vmul.f32 %v1246, 0.5
    %v1279 = vmul.f32 %v1247, 0.5
    %v1280 = vmul.f32 %v1248, 0.5
    %v1281 = vmul.f32 %v1249, 0.5
    %v1282 = vmul.f32 %v1250, 0.5
    %v1283 = vmul.f32 %v1251, 0.5
    %v1284 = vmul.f32 %v1252, 0.5
    %v1285 = vmul.f32 %v1253, 0.5
    %v1286 = vmul.f32 %v1254, 0.5
    %v1287 = vmul.f32 %v1255, 0.5
    %v1288 = vmul.f32 %v1256, 0.5
    %v1289 = vmul.f32 %v1257, 0.5
    %v1290 = vmul.f32 %v1258, 0.5
    %v1291 = vmul.f32 %v1259, 0.5
    %v1292 = vmul.f32 %v1260, 0.5
    %v1293 = vmul.f32 %v1261, 0.5
    %v1294 = vmul.f32 %v1262, 0.5
    %v1295 = vmul.f32 %v1263, 0.5
    %v1296 = vmul.f32 %v1264, 0.5
    %v1297 = vmul.f32 %v1265, 0.5
    %v1298 = vmul.f32 %v1266, 0.5
    %v1299 = vmul.f32 %v1267, 0.5
    %v1300 = vmul.f32 %v1268, 0.5
    %v1301 = vmul.f32 %v1269, 0.5
    %v1302 = vmul.f32 %v1270, 0.5
    %v1303 = vmul.f32 %v1271, 0.5
    %v1304 = vmul.f32 %v1272, 0.5
    %v1305 = vmul.f32 %v1017, %v1273
    %v1306 = vmul.f32 %v1018, %v1274
    %v1307 = vmul.f32 %v1019, %v1275
    %v1308 = vmul.f32 %v1020, %v1276
    %v1309 = vmul.f32 %v1021, %v1277
    %v1310 = vmul.f32 %v1022, %v1278
    %v1311 = vmul.f32 %v1023, %v1279
    %v1312 = vmul.f32 %v1024, %v1280
    %v1313 = vmul.f32 %v1025, %v1281
    %v1314 = vmul.f32 %v1026, %v1282
    %v1315 = vmul.f32 %v1027, %v1283
    %v1316 = vmul.f32 %v1028, %v1284
    %v1317 = vmul.f32 %v1029, %v1285
    %v1318 = vmul.f32 %v1030, %v1286
    %v1319 = vmul.f32 %v1031, %v1287
    %v1320 = vmul.f32 %v1032, %v1288
    %v1321 = vmul.f32 %v1033, %v1289
    %v1322 = vmul.f32 %v1034, %v1290
    %v1323 = vmul.f32 %v1035, %v1291
    %v1324 = vmul.f32 %v1036, %v1292
    %v1325 = vmul.f32 %v1037, %v1293
    %v1326 = vmul.f32 %v1038, %v1294
    %v1327 = vmul.f32 %v1039, %v1295
    %v1328 = vmul.f32 %v1040, %v1296
    %v1329 = vmul.f32 %v1041, %v1297
    %v1330 = vmul.f32 %v1042, %v1298
    %v1331 = vmul.f32 %v1043, %v1299
    %v1332 = vmul.f32 %v1044, %v1300
    %v1333 = vmul.f32 %v1045, %v1301
    %v1334 = vmul.f32 %v1046, %v1302
    %v1335 = vmul.f32 %v1047, %v1303
    %v1336 = vmul.f32 %v1048, %v1304
    %1337 = vmatprep.subr.mxu0 %v1306
    %1338 = vmatpush1.msra.mxu0 %v1305
    %1339 = vmatprep.subr.mxu0 %v1310
    %1340 = vmatpush1.msra.mxu0 %v1309
    %1341 = vmatprep.subr.mxu0 %v1314
    %1342 = vmatpush1.msra.mxu0 %v1313
    %1343 = vmatprep.subr.mxu0 %v1318
    %1344 = vmatpush1.msra.mxu0 %v1317
    %1345 = vmatprep.subr.mxu0 %v1322
    %1346 = vmatpush1.msra.mxu0 %v1321
    %1347 = vmatprep.subr.mxu0 %v1326
    %1348 = vmatpush1.msra.mxu0 %v1325
    %1349 = vmatprep.subr.mxu0 %v1330
    %1350 = vmatpush1.msra.mxu0 %v1329
    %1351 = vmatprep.subr.mxu0 %v1334
    %1352 = vmatpush1.msra.mxu0 %v1333
    %1353 = vmatprep.subr.mxu0 0.0
    %1354 = vmatpush1.msra.mxu0 0.0
    %1355 = vmatprep.subr.mxu0 0.0
    %1356 = vmatpush1.msra.mxu0 0.0
    %1357 = vmatprep.subr.mxu0 0.0
    %1358 = vmatpush1.msra.mxu0 0.0
    %1359 = vmatprep.subr.mxu0 0.0
    %1360 = vmatpush1.msra.mxu0 0.0
    %1361 = vmatprep.subr.mxu0 0.0
    %1362 = vmatpush1.msra.mxu0 0.0
    %1363 = vmatprep.subr.mxu0 0.0
    %1364 = vmatpush1.msra.mxu0 0.0
    %1365 = vmatprep.subr.mxu0 0.0
    %1366 = vmatpush1.msra.mxu0 0.0
    %1367 = vmatprep.subr.mxu0 0.0
    %1368 = vmatpush1.msra.mxu0 0.0
    %1369 = vmatprep.subr.mxu0 0.0
    %1370 = vmatpush1.msra.mxu0 0.0
    %1371 = vmatprep.subr.mxu0 0.0
    %1372 = vmatpush1.msra.mxu0 0.0
    %1373 = vmatprep.subr.mxu0 0.0
    %1374 = vmatpush1.msra.mxu0 0.0
    %1375 = vmatprep.subr.mxu0 0.0
    %1376 = vmatpush1.msra.mxu0 0.0
    %1377 = vmatprep.subr.mxu0 0.0
    %1378 = vmatpush1.msra.mxu0 0.0
    %1379 = vmatprep.subr.mxu0 0.0
    %1380 = vmatpush1.msra.mxu0 0.0
    %1381 = vmatprep.subr.mxu0 0.0
    %1382 = vmatpush1.msra.mxu0 0.0
    %1383 = vmatprep.subr.mxu0 0.0
    %1384 = vmatpush1.msra.mxu0 0.0
    %1385 = vmatprep.subr.mxu0 0.0
    %1386 = vmatpush1.msra.mxu0 0.0
    %1387 = vmatprep.subr.mxu0 0.0
    %1388 = vmatpush1.msra.mxu0 0.0
    %1389 = vmatprep.subr.mxu0 0.0
    %1390 = vmatpush1.msra.mxu0 0.0
    %1391 = vmatprep.subr.mxu0 0.0
    %1392 = vmatpush1.msra.mxu0 0.0
    %1393 = vmatprep.subr.mxu0 0.0
    %1394 = vmatpush1.msra.mxu0 0.0
    %1395 = vmatprep.subr.mxu0 0.0
    %1396 = vmatpush1.msra.mxu0 0.0
    %1397 = vmatprep.subr.mxu0 0.0
    %1398 = vmatpush1.msra.mxu0 0.0
    %1399 = vmatprep.subr.mxu0 0.0
    %1400 = vmatpush1.msra.mxu0 0.0
    %1401 = vmatprep.mubr.f32.mxu0 0.0
    %1402 = vmatmul.mubr.f32.gmra.mrb[0].mxu0 %v607
    %v1403 = vpop.f32.mrb[0].mxu0
    %v1404 = vadd.f32 0.0, %v1403
    %v1405 = vpop.f32.mrb[0].mxu0
    %v1406 = vadd.f32 0.0, %v1405
    %1407 = vdwg.mxu0
    %1408 = vmatprep.subr.mxu0 %v1308
    %1409 = vmatpush1.msra.mxu0 %v1307
    %1410 = vmatprep.subr.mxu0 %v1312
    %1411 = vmatpush1.msra.mxu0 %v1311
    %1412 = vmatprep.subr.mxu0 %v1316
    %1413 = vmatpush1.msra.mxu0 %v1315
    %1414 = vmatprep.subr.mxu0 %v1320
    %1415 = vmatpush1.msra.mxu0 %v1319
    %1416 = vmatprep.subr.mxu0 %v1324
    %1417 = vmatpush1.msra.mxu0 %v1323
    %1418 = vmatprep.subr.mxu0 %v1328
    %1419 = vmatpush1.msra.mxu0 %v1327
    %1420 = vmatprep.subr.mxu0 %v1332
    %1421 = vmatpush1.msra.mxu0 %v1331
    %1422 = vmatprep.subr.mxu0 %v1336
    %1423 = vmatpush1.msra.mxu0 %v1335
    %1424 = vmatprep.subr.mxu0 0.0
    %1425 = vmatpush1.msra.mxu0 0.0
    %1426 = vmatprep.subr.mxu0 0.0
    %1427 = vmatpush1.msra.mxu0 0.0
    %1428 = vmatprep.subr.mxu0 0.0
    %1429 = vmatpush1.msra.mxu0 0.0
    %1430 = vmatprep.subr.mxu0 0.0
    %1431 = vmatpush1.msra.mxu0 0.0
    %1432 = vmatprep.subr.mxu0 0.0
    %1433 = vmatpush1.msra.mxu0 0.0
    %1434 = vmatprep.subr.mxu0 0.0
    %1435 = vmatpush1.msra.mxu0 0.0
    %1436 = vmatprep.subr.mxu0 0.0
    %1437 = vmatpush1.msra.mxu0 0.0
    %1438 = vmatprep.subr.mxu0 0.0
    %1439 = vmatpush1.msra.mxu0 0.0
    %1440 = vmatprep.subr.mxu0 0.0
    %1441 = vmatpush1.msra.mxu0 0.0
    %1442 = vmatprep.subr.mxu0 0.0
    %1443 = vmatpush1.msra.mxu0 0.0
    %1444 = vmatprep.subr.mxu0 0.0
    %1445 = vmatpush1.msra.mxu0 0.0
    %1446 = vmatprep.subr.mxu0 0.0
    %1447 = vmatpush1.msra.mxu0 0.0
    %1448 = vmatprep.subr.mxu0 0.0
    %1449 = vmatpush1.msra.mxu0 0.0
    %1450 = vmatprep.subr.mxu0 0.0
    %1451 = vmatpush1.msra.mxu0 0.0
    %1452 = vmatprep.subr.mxu0 0.0
    %1453 = vmatpush1.msra.mxu0 0.0
    %1454 = vmatprep.subr.mxu0 0.0
    %1455 = vmatpush1.msra.mxu0 0.0
    %1456 = vmatprep.subr.mxu0 0.0
    %1457 = vmatpush1.msra.mxu0 0.0
    %1458 = vmatprep.subr.mxu0 0.0
    %1459 = vmatpush1.msra.mxu0 0.0
    %1460 = vmatprep.subr.mxu0 0.0
    %1461 = vmatpush1.msra.mxu0 0.0
    %1462 = vmatprep.subr.mxu0 0.0
    %1463 = vmatpush1.msra.mxu0 0.0
    %1464 = vmatprep.subr.mxu0 0.0
    %1465 = vmatpush1.msra.mxu0 0.0
    %1466 = vmatprep.subr.mxu0 0.0
    %1467 = vmatpush1.msra.mxu0 0.0
    %1468 = vmatprep.subr.mxu0 0.0
    %1469 = vmatpush1.msra.mxu0 0.0
    %1470 = vmatprep.subr.mxu0 0.0
    %1471 = vmatpush1.msra.mxu0 0.0
    %1472 = vmatprep.mubr.f32.mxu0 0.0
    %1473 = vmatmul.mubr.f32.gmra.mrb[0].mxu0 %v607
    %v1474 = vpop.f32.mrb[0].mxu0
    %v1475 = vadd.f32 0.0, %v1474
    %v1476 = vpop.f32.mrb[0].mxu0
    %v1477 = vadd.f32 0.0, %v1476
    %1478 = vdwg.mxu0
    %v1479 = vstv %s789
    %v1480 = vmul.f32 %v1479, %v787
    %v1481 = vmul.f32 %v1479, %v788
    %v1482 = vstv %s790
    %v1483 = vmul.f32 %v1482, %v1404
    %v1484 = vmul.f32 %v1482, %v1406
    %v1485 = vmul.f32 %v1482, %v1475
    %v1486 = vmul.f32 %v1482, %v1477
    %v1491 = vcombine.low %v1483, %v1484
    %v1492 = vcombine.low %v1485, %v1486
    %v1495 = vsub.f32 %v1480, %v1491
    %v1496 = vsub.f32 %v1481, %v1492
    %v1497 = vmax.f32 %v1495, -1.0
    %v1498 = vmax.f32 %v1496, -1.0
    %v1499 = vmin.f32 %v1497, 1.0
    %v1500 = vmin.f32 %v1498, 1.0
    %v1501 = vstv %s791
    %v1502 = vmul.f32 %v1501, %v1499
    %v1503 = vmul.f32 %v1501, %v1500
    %v1504 = vstv %s792
    %v1505 = vmul.f32 %v1504, %v787
    %v1506 = vmul.f32 %v1504, %v788
    %v1507 = vadd.f32 %v1502, %v1505
    %v1508 = vadd.f32 %v1503, %v1506
    %s1509 = scalar_lea.vmem %s5, 16
    %v1510 = vld [vmem:[%s1509] sm:$0xff]
    %v1511 = vld [vmem:[%s1509 + $0x8] sm:$0xff]
    %v1512 = vstv %s793
    %v1513 = vmul.f32 %v1512, %v1510
    %v1514 = vmul.f32 %v1512, %v1511
    %v1515 = vadd.f32 %v1507, %v1513
    %v1516 = vadd.f32 %v1508, %v1514
    %s1517 = sld [smem:[#allocation2]]
    %s1518 = sld [smem:[#allocation2 + $0x1]]
    %s1519 = sld [smem:[#allocation2 + $0x2]]
    %s1520 = sld [smem:[#allocation2 + $0x3]]
    %s1521 = sld [smem:[#allocation2 + $0x4]]
    %v1524 = vcombine.high %v1515, %v1515
    %v1525 = vcombine.high %v1516, %v1516
    %v1526 = vsel %vm65, %v1515, 0
    %v1528 = vsel %vm65, %v1524, 0
    %v1530 = vsel %vm65, %v1516, 0
    %v1532 = vsel %vm65, %v1525, 0
    %1534 = vmatprep.subr.mxu0 %v1528
    %1535 = vmatpush1.msra.mxu0 %v1526
    %1536 = vmatprep.subr.mxu0 0.0
    %1537 = vmatpush1.msra.mxu0 0.0
    %1538 = vmatprep.subr.mxu0 0.0
    %1539 = vmatpush1.msra.mxu0 0.0
    %1540 = vmatprep.subr.mxu0 0.0
    %1541 = vmatpush1.msra.mxu0 0.0
    %1542 = vmatprep.subr.mxu0 0.0
    %1543 = vmatpush1.msra.mxu0 0.0
    %1544 = vmatprep.subr.mxu0 0.0
    %1545 = vmatpush1.msra.mxu0 0.0
    %1546 = vmatprep.subr.mxu0 0.0
    %1547 = vmatpush1.msra.mxu0 0.0
    %1548 = vmatprep.subr.mxu0 0.0
    %1549 = vmatpush1.msra.mxu0 0.0
    %1550 = vmatprep.subr.mxu0 0.0
    %1551 = vmatpush1.msra.mxu0 0.0
    %1552 = vmatprep.subr.mxu0 0.0
    %1553 = vmatpush1.msra.mxu0 0.0
    %1554 = vmatprep.subr.mxu0 0.0
    %1555 = vmatpush1.msra.mxu0 0.0
    %1556 = vmatprep.subr.mxu0 0.0
    %1557 = vmatpush1.msra.mxu0 0.0
    %1558 = vmatprep.subr.mxu0 0.0
    %1559 = vmatpush1.msra.mxu0 0.0
    %1560 = vmatprep.subr.mxu0 0.0
    %1561 = vmatpush1.msra.mxu0 0.0
    %1562 = vmatprep.subr.mxu0 0.0
    %1563 = vmatpush1.msra.mxu0 0.0
    %1564 = vmatprep.subr.mxu0 0.0
    %1565 = vmatpush1.msra.mxu0 0.0
    %1566 = vmatprep.subr.mxu0 0.0
    %1567 = vmatpush1.msra.mxu0 0.0
    %1568 = vmatprep.subr.mxu0 0.0
    %1569 = vmatpush1.msra.mxu0 0.0
    %1570 = vmatprep.subr.mxu0 0.0
    %1571 = vmatpush1.msra.mxu0 0.0
    %1572 = vmatprep.subr.mxu0 0.0
    %1573 = vmatpush1.msra.mxu0 0.0
    %1574 = vmatprep.subr.mxu0 0.0
    %1575 = vmatpush1.msra.mxu0 0.0
    %1576 = vmatprep.subr.mxu0 0.0
    %1577 = vmatpush1.msra.mxu0 0.0
    %1578 = vmatprep.subr.mxu0 0.0
    %1579 = vmatpush1.msra.mxu0 0.0
    %1580 = vmatprep.subr.mxu0 0.0
    %1581 = vmatpush1.msra.mxu0 0.0
    %1582 = vmatprep.subr.mxu0 0.0
    %1583 = vmatpush1.msra.mxu0 0.0
    %1584 = vmatprep.subr.mxu0 0.0
    %1585 = vmatpush1.msra.mxu0 0.0
    %1586 = vmatprep.subr.mxu0 0.0
    %1587 = vmatpush1.msra.mxu0 0.0
    %1588 = vmatprep.subr.mxu0 0.0
    %1589 = vmatpush1.msra.mxu0 0.0
    %1590 = vmatprep.subr.mxu0 0.0
    %1591 = vmatpush1.msra.mxu0 0.0
    %1592 = vmatprep.subr.mxu0 0.0
    %1593 = vmatpush1.msra.mxu0 0.0
    %1594 = vmatprep.subr.mxu0 0.0
    %1595 = vmatpush1.msra.mxu0 0.0
    %1596 = vmatprep.subr.mxu0 0.0
    %1597 = vmatpush1.msra.mxu0 0.0
    %1598 = vmatprep.mubr.f32.mxu0 0.0
    %1599 = vmatmul.mubr.f32.gmra.mrb[0].mxu0 %v54
    %v1600 = vpop.f32.mrb[0].mxu0
    %v1601 = vadd.f32 0.0, %v1600
    %v1602 = vpop.f32.mrb[0].mxu0
    %v1603 = vadd.f32 0.0, %v1602
    %1604 = vmatprep.mubr.f32.mxu0 0.0
    %1605 = vmatmul.mubr.f32.gmra.mrb[0].mxu0 %v57
    %v1606 = vpop.f32.mrb[0].mxu0
    %v1607 = vadd.f32 0.0, %v1606
    %v1608 = vpop.f32.mrb[0].mxu0
    %v1609 = vadd.f32 0.0, %v1608
    %1610 = vmatprep.mubr.f32.mxu0 0.0
    %1611 = vmatmul.mubr.f32.gmra.mrb[0].mxu0 %v60
    %v1612 = vpop.f32.mrb[0].mxu0
    %v1613 = vadd.f32 0.0, %v1612
    %v1614 = vpop.f32.mrb[0].mxu0
    %v1615 = vadd.f32 0.0, %v1614
    %1616 = vmatprep.mubr.f32.mxu0 0.0
    %1617 = vmatmul.mubr.f32.gmra.mrb[0].mxu0 %v63
    %v1618 = vpop.f32.mrb[0].mxu0
    %v1619 = vadd.f32 0.0, %v1618
    %v1620 = vpop.f32.mrb[0].mxu0
    %v1621 = vadd.f32 0.0, %v1620
    %1622 = vdwg.mxu0
    %1623 = vmatprep.subr.mxu0 %v1532
    %1624 = vmatpush1.msra.mxu0 %v1530
    %1625 = vmatprep.subr.mxu0 0.0
    %1626 = vmatpush1.msra.mxu0 0.0
    %1627 = vmatprep.subr.mxu0 0.0
    %1628 = vmatpush1.msra.mxu0 0.0
    %1629 = vmatprep.subr.mxu0 0.0
    %1630 = vmatpush1.msra.mxu0 0.0
    %1631 = vmatprep.subr.mxu0 0.0
    %1632 = vmatpush1.msra.mxu0 0.0
    %1633 = vmatprep.subr.mxu0 0.0
    %1634 = vmatpush1.msra.mxu0 0.0
    %1635 = vmatprep.subr.mxu0 0.0
    %1636 = vmatpush1.msra.mxu0 0.0
    %1637 = vmatprep.subr.mxu0 0.0
    %1638 = vmatpush1.msra.mxu0 0.0
    %1639 = vmatprep.subr.mxu0 0.0
    %1640 = vmatpush1.msra.mxu0 0.0
    %1641 = vmatprep.subr.mxu0 0.0
    %1642 = vmatpush1.msra.mxu0 0.0
    %1643 = vmatprep.subr.mxu0 0.0
    %1644 = vmatpush1.msra.mxu0 0.0
    %1645 = vmatprep.subr.mxu0 0.0
    %1646 = vmatpush1.msra.mxu0 0.0
    %1647 = vmatprep.subr.mxu0 0.0
    %1648 = vmatpush1.msra.mxu0 0.0
    %1649 = vmatprep.subr.mxu0 0.0
    %1650 = vmatpush1.msra.mxu0 0.0
    %1651 = vmatprep.subr.mxu0 0.0
    %1652 = vmatpush1.msra.mxu0 0.0
    %1653 = vmatprep.subr.mxu0 0.0
    %1654 = vmatpush1.msra.mxu0 0.0
    %1655 = vmatprep.subr.mxu0 0.0
    %1656 = vmatpush1.msra.mxu0 0.0
    %1657 = vmatprep.subr.mxu0 0.0
    %1658 = vmatpush1.msra.mxu0 0.0
    %1659 = vmatprep.subr.mxu0 0.0
    %1660 = vmatpush1.msra.mxu0 0.0
    %1661 = vmatprep.subr.mxu0 0.0
    %1662 = vmatpush1.msra.mxu0 0.0
    %1663 = vmatprep.subr.mxu0 0.0
    %1664 = vmatpush1.msra.mxu0 0.0
    %1665 = vmatprep.subr.mxu0 0.0
    %1666 = vmatpush1.msra.mxu0 0.0
    %1667 = vmatprep.subr.mxu0 0.0
    %1668 = vmatpush1.msra.mxu0 0.0
    %1669 = vmatprep.subr.mxu0 0.0
    %1670 = vmatpush1.msra.mxu0 0.0
    %1671 = vmatprep.subr.mxu0 0.0
    %1672 = vmatpush1.msra.mxu0 0.0
    %1673 = vmatprep.subr.mxu0 0.0
    %1674 = vmatpush1.msra.mxu0 0.0
    %1675 = vmatprep.subr.mxu0 0.0
    %1676 = vmatpush1.msra.mxu0 0.0
    %1677 = vmatprep.subr.mxu0 0.0
    %1678 = vmatpush1.msra.mxu0 0.0
    %1679 = vmatprep.subr.mxu0 0.0
    %1680 = vmatpush1.msra.mxu0 0.0
    %1681 = vmatprep.subr.mxu0 0.0
    %1682 = vmatpush1.msra.mxu0 0.0
    %1683 = vmatprep.subr.mxu0 0.0
    %1684 = vmatpush1.msra.mxu0 0.0
    %1685 = vmatprep.subr.mxu0 0.0
    %1686 = vmatpush1.msra.mxu0 0.0
    %1687 = vmatprep.mubr.f32.mxu0 0.0
    %1688 = vmatmul.mubr.f32.gmra.mrb[0].mxu0 %v54
    %v1689 = vpop.f32.mrb[0].mxu0
    %v1690 = vadd.f32 0.0, %v1689
    %v1691 = vpop.f32.mrb[0].mxu0
    %v1692 = vadd.f32 0.0, %v1691
    %1693 = vmatprep.mubr.f32.mxu0 0.0
    %1694 = vmatmul.mubr.f32.gmra.mrb[0].mxu0 %v57
    %v1695 = vpop.f32.mrb[0].mxu0
    %v1696 = vadd.f32 0.0, %v1695
    %v1697 = vpop.f32.mrb[0].mxu0
    %v1698 = vadd.f32 0.0, %v1697
    %1699 = vmatprep.mubr.f32.mxu0 0.0
    %1700 = vmatmul.mubr.f32.gmra.mrb[0].mxu0 %v60
    %v1701 = vpop.f32.mrb[0].mxu0
    %v1702 = vadd.f32 0.0, %v1701
    %v1703 = vpop.f32.mrb[0].mxu0
    %v1704 = vadd.f32 0.0, %v1703
    %1705 = vmatprep.mubr.f32.mxu0 0.0
    %1706 = vmatmul.mubr.f32.gmra.mrb[0].mxu0 %v63
    %v1707 = vpop.f32.mrb[0].mxu0
    %v1708 = vadd.f32 0.0, %v1707
    %v1709 = vpop.f32.mrb[0].mxu0
    %v1710 = vadd.f32 0.0, %v1709
    %1711 = vdwg.mxu0
    %v1712 = vld [vmem:[%s4] sm:$0xff]
    %v1713 = vld [vmem:[%s4 + $0x8] sm:$0xff]
    %v1714 = vld [vmem:[%s4 + $0x10] sm:$0xff]
    %v1715 = vld [vmem:[%s4 + $0x18] sm:$0xff]
    %v1716 = vld [vmem:[%s4 + $0x20] sm:$0xff]
    %v1717 = vld [vmem:[%s4 + $0x28] sm:$0xff]
    %v1718 = vld [vmem:[%s4 + $0x30] sm:$0xff]
    %v1719 = vld [vmem:[%s4 + $0x38] sm:$0xff]
    %v1720 = vld [vmem:[%s4 + $0x40] sm:$0xff]
    %v1721 = vld [vmem:[%s4 + $0x48] sm:$0xff]
    %v1722 = vld [vmem:[%s4 + $0x50] sm:$0xff]
    %v1723 = vld [vmem:[%s4 + $0x58] sm:$0xff]
    %v1724 = vld [vmem:[%s4 + $0x60] sm:$0xff]
    %v1725 = vld [vmem:[%s4 + $0x68] sm:$0xff]
    %v1726 = vld [vmem:[%s4 + $0x70] sm:$0xff]
    %v1727 = vld [vmem:[%s4 + $0x78] sm:$0xff]
    %v1728 = vld [vmem:[%s4 + $0x80] sm:$0xff]
    %v1729 = vld [vmem:[%s4 + $0x88] sm:$0xff]
    %v1730 = vld [vmem:[%s4 + $0x90] sm:$0xff]
    %v1731 = vld [vmem:[%s4 + $0x98] sm:$0xff]
    %v1732 = vld [vmem:[%s4 + $0xa0] sm:$0xff]
    %v1733 = vld [vmem:[%s4 + $0xa8] sm:$0xff]
    %v1734 = vld [vmem:[%s4 + $0xb0] sm:$0xff]
    %v1735 = vld [vmem:[%s4 + $0xb8] sm:$0xff]
    %v1736 = vld [vmem:[%s4 + $0xc0] sm:$0xff]
    %v1737 = vld [vmem:[%s4 + $0xc8] sm:$0xff]
    %v1738 = vld [vmem:[%s4 + $0xd0] sm:$0xff]
    %v1739 = vld [vmem:[%s4 + $0xd8] sm:$0xff]
    %v1740 = vld [vmem:[%s4 + $0xe0] sm:$0xff]
    %v1741 = vld [vmem:[%s4 + $0xe8] sm:$0xff]
    %v1742 = vld [vmem:[%s4 + $0xf0] sm:$0xff]
    %v1743 = vld [vmem:[%s4 + $0xf8] sm:$0xff]
    %v1744 = vadd.f32 %v1601, %v1712
    %v1745 = vadd.f32 %v1603, %v1713
    %v1746 = vadd.f32 %v1690, %v1714
    %v1747 = vadd.f32 %v1692, %v1715
    %v1748 = vadd.f32 %v1607, %v1716
    %v1749 = vadd.f32 %v1609, %v1717
    %v1750 = vadd.f32 %v1696, %v1718
    %v1751 = vadd.f32 %v1698, %v1719
    %v1752 = vadd.f32 %v1613, %v1720
    %v1753 = vadd.f32 %v1615, %v1721
    %v1754 = vadd.f32 %v1702, %v1722
    %v1755 = vadd.f32 %v1704, %v1723
    %v1756 = vadd.f32 %v1619, %v1724
    %v1757 = vadd.f32 %v1621, %v1725
    %v1758 = vadd.f32 %v1708, %v1726
    %v1759 = vadd.f32 %v1710, %v1727
    %v1760 = vadd.f32 %v1601, %v1728
    %v1761 = vadd.f32 %v1603, %v1729
    %v1762 = vadd.f32 %v1690, %v1730
    %v1763 = vadd.f32 %v1692, %v1731
    %v1764 = vadd.f32 %v1607, %v1732
    %v1765 = vadd.f32 %v1609, %v1733
    %v1766 = vadd.f32 %v1696, %v1734
    %v1767 = vadd.f32 %v1698, %v1735
    %v1768 = vadd.f32 %v1613, %v1736
    %v1769 = vadd.f32 %v1615, %v1737
    %v1770 = vadd.f32 %v1702, %v1738
    %v1771 = vadd.f32 %v1704, %v1739
    %v1772 = vadd.f32 %v1619, %v1740
    %v1773 = vadd.f32 %v1621, %v1741
    %v1774 = vadd.f32 %v1708, %v1742
    %v1775 = vadd.f32 %v1710, %v1743
    %v1776 = vmul.f32 %v1744, %v1744
    %v1777 = vmul.f32 %v1745, %v1745
    %v1778 = vmul.f32 %v1746, %v1746
    %v1779 = vmul.f32 %v1747, %v1747
    %v1780 = vmul.f32 %v1748, %v1748
    %v1781 = vmul.f32 %v1749, %v1749
    %v1782 = vmul.f32 %v1750, %v1750
    %v1783 = vmul.f32 %v1751, %v1751
    %v1784 = vmul.f32 %v1752, %v1752
    %v1785 = vmul.f32 %v1753, %v1753
    %v1786 = vmul.f32 %v1754, %v1754
    %v1787 = vmul.f32 %v1755, %v1755
    %v1788 = vmul.f32 %v1756, %v1756
    %v1789 = vmul.f32 %v1757, %v1757
    %v1790 = vmul.f32 %v1758, %v1758
    %v1791 = vmul.f32 %v1759, %v1759
    %v1792 = vmul.f32 %v1760, %v1760
    %v1793 = vmul.f32 %v1761, %v1761
    %v1794 = vmul.f32 %v1762, %v1762
    %v1795 = vmul.f32 %v1763, %v1763
    %v1796 = vmul.f32 %v1764, %v1764
    %v1797 = vmul.f32 %v1765, %v1765
    %v1798 = vmul.f32 %v1766, %v1766
    %v1799 = vmul.f32 %v1767, %v1767
    %v1800 = vmul.f32 %v1768, %v1768
    %v1801 = vmul.f32 %v1769, %v1769
    %v1802 = vmul.f32 %v1770, %v1770
    %v1803 = vmul.f32 %v1771, %v1771
    %v1804 = vmul.f32 %v1772, %v1772
    %v1805 = vmul.f32 %v1773, %v1773
    %v1806 = vmul.f32 %v1774, %v1774
    %v1807 = vmul.f32 %v1775, %v1775
    %v1808 = vmul.f32 %v1744, %v1776
    %v1809 = vmul.f32 %v1745, %v1777
    %v1810 = vmul.f32 %v1746, %v1778
    %v1811 = vmul.f32 %v1747, %v1779
    %v1812 = vmul.f32 %v1748, %v1780
    %v1813 = vmul.f32 %v1749, %v1781
    %v1814 = vmul.f32 %v1750, %v1782
    %v1815 = vmul.f32 %v1751, %v1783
    %v1816 = vmul.f32 %v1752, %v1784
    %v1817 = vmul.f32 %v1753, %v1785
    %v1818 = vmul.f32 %v1754, %v1786
    %v1819 = vmul.f32 %v1755, %v1787
    %v1820 = vmul.f32 %v1756, %v1788
    %v1821 = vmul.f32 %v1757, %v1789
    %v1822 = vmul.f32 %v1758, %v1790
    %v1823 = vmul.f32 %v1759, %v1791
    %v1824 = vmul.f32 %v1760, %v1792
    %v1825 = vmul.f32 %v1761, %v1793
    %v1826 = vmul.f32 %v1762, %v1794
    %v1827 = vmul.f32 %v1763, %v1795
    %v1828 = vmul.f32 %v1764, %v1796
    %v1829 = vmul.f32 %v1765, %v1797
    %v1830 = vmul.f32 %v1766, %v1798
    %v1831 = vmul.f32 %v1767, %v1799
    %v1832 = vmul.f32 %v1768, %v1800
    %v1833 = vmul.f32 %v1769, %v1801
    %v1834 = vmul.f32 %v1770, %v1802
    %v1835 = vmul.f32 %v1771, %v1803
    %v1836 = vmul.f32 %v1772, %v1804
    %v1837 = vmul.f32 %v1773, %v1805
    %v1838 = vmul.f32 %v1774, %v1806
    %v1839 = vmul.f32 %v1775, %v1807
    %v1840 = vmul.f32 %v1808, 0.044715
    %v1841 = vmul.f32 %v1809, 0.044715
    %v1842 = vmul.f32 %v1810, 0.044715
    %v1843 = vmul.f32 %v1811, 0.044715
    %v1844 = vmul.f32 %v1812, 0.044715
    %v1845 = vmul.f32 %v1813, 0.044715
    %v1846 = vmul.f32 %v1814, 0.044715
    %v1847 = vmul.f32 %v1815, 0.044715
    %v1848 = vmul.f32 %v1816, 0.044715
    %v1849 = vmul.f32 %v1817, 0.044715
    %v1850 = vmul.f32 %v1818, 0.044715
    %v1851 = vmul.f32 %v1819, 0.044715
    %v1852 = vmul.f32 %v1820, 0.044715
    %v1853 = vmul.f32 %v1821, 0.044715
    %v1854 = vmul.f32 %v1822, 0.044715
    %v1855 = vmul.f32 %v1823, 0.044715
    %v1856 = vmul.f32 %v1824, 0.044715
    %v1857 = vmul.f32 %v1825, 0.044715
    %v1858 = vmul.f32 %v1826, 0.044715
    %v1859 = vmul.f32 %v1827, 0.044715
    %v1860 = vmul.f32 %v1828, 0.044715
    %v1861 = vmul.f32 %v1829, 0.044715
    %v1862 = vmul.f32 %v1830, 0.044715
    %v1863 = vmul.f32 %v1831, 0.044715
    %v1864 = vmul.f32 %v1832, 0.044715
    %v1865 = vmul.f32 %v1833, 0.044715
    %v1866 = vmul.f32 %v1834, 0.044715
    %v1867 = vmul.f32 %v1835, 0.044715
    %v1868 = vmul.f32 %v1836, 0.044715
    %v1869 = vmul.f32 %v1837, 0.044715
    %v1870 = vmul.f32 %v1838, 0.044715
    %v1871 = vmul.f32 %v1839, 0.044715
    %v1872 = vadd.f32 %v1744, %v1840
    %v1873 = vadd.f32 %v1745, %v1841
    %v1874 = vadd.f32 %v1746, %v1842
    %v1875 = vadd.f32 %v1747, %v1843
    %v1876 = vadd.f32 %v1748, %v1844
    %v1877 = vadd.f32 %v1749, %v1845
    %v1878 = vadd.f32 %v1750, %v1846
    %v1879 = vadd.f32 %v1751, %v1847
    %v1880 = vadd.f32 %v1752, %v1848
    %v1881 = vadd.f32 %v1753, %v1849
    %v1882 = vadd.f32 %v1754, %v1850
    %v1883 = vadd.f32 %v1755, %v1851
    %v1884 = vadd.f32 %v1756, %v1852
    %v1885 = vadd.f32 %v1757, %v1853
    %v1886 = vadd.f32 %v1758, %v1854
    %v1887 = vadd.f32 %v1759, %v1855
    %v1888 = vadd.f32 %v1760, %v1856
    %v1889 = vadd.f32 %v1761, %v1857
    %v1890 = vadd.f32 %v1762, %v1858
    %v1891 = vadd.f32 %v1763, %v1859
    %v1892 = vadd.f32 %v1764, %v1860
    %v1893 = vadd.f32 %v1765, %v1861
    %v1894 = vadd.f32 %v1766, %v1862
    %v1895 = vadd.f32 %v1767, %v1863
    %v1896 = vadd.f32 %v1768, %v1864
    %v1897 = vadd.f32 %v1769, %v1865
    %v1898 = vadd.f32 %v1770, %v1866
    %v1899 = vadd.f32 %v1771, %v1867
    %v1900 = vadd.f32 %v1772, %v1868
    %v1901 = vadd.f32 %v1773, %v1869
    %v1902 = vadd.f32 %v1774, %v1870
    %v1903 = vadd.f32 %v1775, %v1871
    %v1904 = vmul.f32 %v1872, 0.7978846
    %v1905 = vmul.f32 %v1873, 0.7978846
    %v1906 = vmul.f32 %v1874, 0.7978846
    %v1907 = vmul.f32 %v1875, 0.7978846
    %v1908 = vmul.f32 %v1876, 0.7978846
    %v1909 = vmul.f32 %v1877, 0.7978846
    %v1910 = vmul.f32 %v1878, 0.7978846
    %v1911 = vmul.f32 %v1879, 0.7978846
    %v1912 = vmul.f32 %v1880, 0.7978846
    %v1913 = vmul.f32 %v1881, 0.7978846
    %v1914 = vmul.f32 %v1882, 0.7978846
    %v1915 = vmul.f32 %v1883, 0.7978846
    %v1916 = vmul.f32 %v1884, 0.7978846
    %v1917 = vmul.f32 %v1885, 0.7978846
    %v1918 = vmul.f32 %v1886, 0.7978846
    %v1919 = vmul.f32 %v1887, 0.7978846
    %v1920 = vmul.f32 %v1888, 0.7978846
    %v1921 = vmul.f32 %v1889, 0.7978846
    %v1922 = vmul.f32 %v1890, 0.7978846
    %v1923 = vmul.f32 %v1891, 0.7978846
    %v1924 = vmul.f32 %v1892, 0.7978846
    %v1925 = vmul.f32 %v1893, 0.7978846
    %v1926 = vmul.f32 %v1894, 0.7978846
    %v1927 = vmul.f32 %v1895, 0.7978846
    %v1928 = vmul.f32 %v1896, 0.7978846
    %v1929 = vmul.f32 %v1897, 0.7978846
    %v1930 = vmul.f32 %v1898, 0.7978846
    %v1931 = vmul.f32 %v1899, 0.7978846
    %v1932 = vmul.f32 %v1900, 0.7978846
    %v1933 = vmul.f32 %v1901, 0.7978846
    %v1934 = vmul.f32 %v1902, 0.7978846
    %v1935 = vmul.f32 %v1903, 0.7978846
    %v1936 = vtanh.pop %v1904
    %v1937 = vtanh.pop %v1905
    %v1938 = vtanh.pop %v1906
    %v1939 = vtanh.pop %v1907
    %v1940 = vtanh.pop %v1908
    %v1941 = vtanh.pop %v1909
    %v1942 = vtanh.pop %v1910
    %v1943 = vtanh.pop %v1911
    %v1944 = vtanh.pop %v1912
    %v1945 = vtanh.pop %v1913
    %v1946 = vtanh.pop %v1914
    %v1947 = vtanh.pop %v1915
    %v1948 = vtanh.pop %v1916
    %v1949 = vtanh.pop %v1917
    %v1950 = vtanh.pop %v1918
    %v1951 = vtanh.pop %v1919
    %v1952 = vtanh.pop %v1920
    %v1953 = vtanh.pop %v1921
    %v1954 = vtanh.pop %v1922
    %v1955 = vtanh.pop %v1923
    %v1956 = vtanh.pop %v1924
    %v1957 = vtanh.pop %v1925
    %v1958 = vtanh.pop %v1926
    %v1959 = vtanh.pop %v1927
    %v1960 = vtanh.pop %v1928
    %v1961 = vtanh.pop %v1929
    %v1962 = vtanh.pop %v1930
    %v1963 = vtanh.pop %v1931
    %v1964 = vtanh.pop %v1932
    %v1965 = vtanh.pop %v1933
    %v1966 = vtanh.pop %v1934
    %v1967 = vtanh.pop %v1935
    %v1968 = vadd.f32 %v1936, 1.0
    %v1969 = vadd.f32 %v1937, 1.0
    %v1970 = vadd.f32 %v1938, 1.0
    %v1971 = vadd.f32 %v1939, 1.0
    %v1972 = vadd.f32 %v1940, 1.0
    %v1973 = vadd.f32 %v1941, 1.0
    %v1974 = vadd.f32 %v1942, 1.0
    %v1975 = vadd.f32 %v1943, 1.0
    %v1976 = vadd.f32 %v1944, 1.0
    %v1977 = vadd.f32 %v1945, 1.0
    %v1978 = vadd.f32 %v1946, 1.0
    %v1979 = vadd.f32 %v1947, 1.0
    %v1980 = vadd.f32 %v1948, 1.0
    %v1981 = vadd.f32 %v1949, 1.0
    %v1982 = vadd.f32 %v1950, 1.0
    %v1983 = vadd.f32 %v1951, 1.0
    %v1984 = vadd.f32 %v1952, 1.0
    %v1985 = vadd.f32 %v1953, 1.0
    %v1986 = vadd.f32 %v1954, 1.0
    %v1987 = vadd.f32 %v1955, 1.0
    %v1988 = vadd.f32 %v1956, 1.0
    %v1989 = vadd.f32 %v1957, 1.0
    %v1990 = vadd.f32 %v1958, 1.0
    %v1991 = vadd.f32 %v1959, 1.0
    %v1992 = vadd.f32 %v1960, 1.0
    %v1993 = vadd.f32 %v1961, 1.0
    %v1994 = vadd.f32 %v1962, 1.0
    %v1995 = vadd.f32 %v1963, 1.0
    %v1996 = vadd.f32 %v1964, 1.0
    %v1997 = vadd.f32 %v1965, 1.0
    %v1998 = vadd.f32 %v1966, 1.0
    %v1999 = vadd.f32 %v1967, 1.0
    %v2000 = vmul.f32 %v1968, 0.5
    %v2001 = vmul.f32 %v1969, 0.5
    %v2002 = vmul.f32 %v1970, 0.5
    %v2003 = vmul.f32 %v1971, 0.5
    %v2004 = vmul.f32 %v1972, 0.5
    %v2005 = vmul.f32 %v1973, 0.5
    %v2006 = vmul.f32 %v1974, 0.5
    %v2007 = vmul.f32 %v1975, 0.5
    %v2008 = vmul.f32 %v1976, 0.5
    %v2009 = vmul.f32 %v1977, 0.5
    %v2010 = vmul.f32 %v1978, 0.5
    %v2011 = vmul.f32 %v1979, 0.5
    %v2012 = vmul.f32 %v1980, 0.5
    %v2013 = vmul.f32 %v1981, 0.5
    %v2014 = vmul.f32 %v1982, 0.5
    %v2015 = vmul.f32 %v1983, 0.5
    %v2016 = vmul.f32 %v1984, 0.5
    %v2017 = vmul.f32 %v1985, 0.5
    %v2018 = vmul.f32 %v1986, 0.5
    %v2019 = vmul.f32 %v1987, 0.5
    %v2020 = vmul.f32 %v1988, 0.5
    %v2021 = vmul.f32 %v1989, 0.5
    %v2022 = vmul.f32 %v1990, 0.5
    %v2023 = vmul.f32 %v1991, 0.5
    %v2024 = vmul.f32 %v1992, 0.5
    %v2025 = vmul.f32 %v1993, 0.5
    %v2026 = vmul.f32 %v1994, 0.5
    %v2027 = vmul.f32 %v1995, 0.5
    %v2028 = vmul.f32 %v1996, 0.5
    %v2029 = vmul.f32 %v1997, 0.5
    %v2030 = vmul.f32 %v1998, 0.5
    %v2031 = vmul.f32 %v1999, 0.5
    %v2032 = vmul.f32 %v1744, %v2000
    %v2033 = vmul.f32 %v1745, %v2001
    %v2034 = vmul.f32 %v1746, %v2002
    %v2035 = vmul.f32 %v1747, %v2003
    %v2036 = vmul.f32 %v1748, %v2004
    %v2037 = vmul.f32 %v1749, %v2005
    %v2038 = vmul.f32 %v1750, %v2006
    %v2039 = vmul.f32 %v1751, %v2007
    %v2040 = vmul.f32 %v1752, %v2008
    %v2041 = vmul.f32 %v1753, %v2009
    %v2042 = vmul.f32 %v1754, %v2010
    %v2043 = vmul.f32 %v1755, %v2011
    %v2044 = vmul.f32 %v1756, %v2012
    %v2045 = vmul.f32 %v1757, %v2013
    %v2046 = vmul.f32 %v1758, %v2014
    %v2047 = vmul.f32 %v1759, %v2015
    %v2048 = vmul.f32 %v1760, %v2016
    %v2049 = vmul.f32 %v1761, %v2017
    %v2050 = vmul.f32 %v1762, %v2018
    %v2051 = vmul.f32 %v1763, %v2019
    %v2052 = vmul.f32 %v1764, %v2020
    %v2053 = vmul.f32 %v1765, %v2021
    %v2054 = vmul.f32 %v1766, %v2022
    %v2055 = vmul.f32 %v1767, %v2023
    %v2056 = vmul.f32 %v1768, %v2024
    %v2057 = vmul.f32 %v1769, %v2025
    %v2058 = vmul.f32 %v1770, %v2026
    %v2059 = vmul.f32 %v1771, %v2027
    %v2060 = vmul.f32 %v1772, %v2028
    %v2061 = vmul.f32 %v1773, %v2029
    %v2062 = vmul.f32 %v1774, %v2030
    %v2063 = vmul.f32 %v1775, %v2031
    %2064 = vmatprep.subr.mxu0 %v2033
    %2065 = vmatpush1.msra.mxu0 %v2032
    %2066 = vmatprep.subr.mxu0 %v2037
    %2067 = vmatpush1.msra.mxu0 %v2036
    %2068 = vmatprep.subr.mxu0 %v2041
    %2069 = vmatpush1.msra.mxu0 %v2040
    %2070 = vmatprep.subr.mxu0 %v2045
    %2071 = vmatpush1.msra.mxu0 %v2044
    %2072 = vmatprep.subr.mxu0 %v2049
    %2073 = vmatpush1.msra.mxu0 %v2048
    %2074 = vmatprep.subr.mxu0 %v2053
    %2075 = vmatpush1.msra.mxu0 %v2052
    %2076 = vmatprep.subr.mxu0 %v2057
    %2077 = vmatpush1.msra.mxu0 %v2056
    %2078 = vmatprep.subr.mxu0 %v2061
    %2079 = vmatpush1.msra.mxu0 %v2060
    %2080 = vmatprep.subr.mxu0 0.0
    %2081 = vmatpush1.msra.mxu0 0.0
    %2082 = vmatprep.subr.mxu0 0.0
    %2083 = vmatpush1.msra.mxu0 0.0
    %2084 = vmatprep.subr.mxu0 0.0
    %2085 = vmatpush1.msra.mxu0 0.0
    %2086 = vmatprep.subr.mxu0 0.0
    %2087 = vmatpush1.msra.mxu0 0.0
    %2088 = vmatprep.subr.mxu0 0.0
    %2089 = vmatpush1.msra.mxu0 0.0
    %2090 = vmatprep.subr.mxu0 0.0
    %2091 = vmatpush1.msra.mxu0 0.0
    %2092 = vmatprep.subr.mxu0 0.0
    %2093 = vmatpush1.msra.mxu0 0.0
    %2094 = vmatprep.subr.mxu0 0.0
    %2095 = vmatpush1.msra.mxu0 0.0
    %2096 = vmatprep.subr.mxu0 0.0
    %2097 = vmatpush1.msra.mxu0 0.0
    %2098 = vmatprep.subr.mxu0 0.0
    %2099 = vmatpush1.msra.mxu0 0.0
    %2100 = vmatprep.subr.mxu0 0.0
    %2101 = vmatpush1.msra.mxu0 0.0
    %2102 = vmatprep.subr.mxu0 0.0
    %2103 = vmatpush1.msra.mxu0 0.0
    %2104 = vmatprep.subr.mxu0 0.0
    %2105 = vmatpush1.msra.mxu0 0.0
    %2106 = vmatprep.subr.mxu0 0.0
    %2107 = vmatpush1.msra.mxu0 0.0
    %2108 = vmatprep.subr.mxu0 0.0
    %2109 = vmatpush1.msra.mxu0 0.0
    %2110 = vmatprep.subr.mxu0 0.0
    %2111 = vmatpush1.msra.mxu0 0.0
    %2112 = vmatprep.subr.mxu0 0.0
    %2113 = vmatpush1.msra.mxu0 0.0
    %2114 = vmatprep.subr.mxu0 0.0
    %2115 = vmatpush1.msra.mxu0 0.0
    %2116 = vmatprep.subr.mxu0 0.0
    %2117 = vmatpush1.msra.mxu0 0.0
    %2118 = vmatprep.subr.mxu0 0.0
    %2119 = vmatpush1.msra.mxu0 0.0
    %2120 = vmatprep.subr.mxu0 0.0
    %2121 = vmatpush1.msra.mxu0 0.0
    %2122 = vmatprep.subr.mxu0 0.0
    %2123 = vmatpush1.msra.mxu0 0.0
    %2124 = vmatprep.subr.mxu0 0.0
    %2125 = vmatpush1.msra.mxu0 0.0
    %2126 = vmatprep.subr.mxu0 0.0
    %2127 = vmatpush1.msra.mxu0 0.0
    %2128 = vmatprep.mubr.f32.mxu0 0.0
    %2129 = vmatmul.mubr.f32.gmra.mrb[0].mxu0 %v607
    %v2130 = vpop.f32.mrb[0].mxu0
    %v2131 = vadd.f32 0.0, %v2130
    %v2132 = vpop.f32.mrb[0].mxu0
    %v2133 = vadd.f32 0.0, %v2132
    %2134 = vdwg.mxu0
    %2135 = vmatprep.subr.mxu0 %v2035
    %2136 = vmatpush1.msra.mxu0 %v2034
    %2137 = vmatprep.subr.mxu0 %v2039
    %2138 = vmatpush1.msra.mxu0 %v2038
    %2139 = vmatprep.subr.mxu0 %v2043
    %2140 = vmatpush1.msra.mxu0 %v2042
    %2141 = vmatprep.subr.mxu0 %v2047
    %2142 = vmatpush1.msra.mxu0 %v2046
    %2143 = vmatprep.subr.mxu0 %v2051
    %2144 = vmatpush1.msra.mxu0 %v2050
    %2145 = vmatprep.subr.mxu0 %v2055
    %2146 = vmatpush1.msra.mxu0 %v2054
    %2147 = vmatprep.subr.mxu0 %v2059
    %2148 = vmatpush1.msra.mxu0 %v2058
    %2149 = vmatprep.subr.mxu0 %v2063
    %2150 = vmatpush1.msra.mxu0 %v2062
    %2151 = vmatprep.subr.mxu0 0.0
    %2152 = vmatpush1.msra.mxu0 0.0
    %2153 = vmatprep.subr.mxu0 0.0
    %2154 = vmatpush1.msra.mxu0 0.0
    %2155 = vmatprep.subr.mxu0 0.0
    %2156 = vmatpush1.msra.mxu0 0.0
    %2157 = vmatprep.subr.mxu0 0.0
    %2158 = vmatpush1.msra.mxu0 0.0
    %2159 = vmatprep.subr.mxu0 0.0
    %2160 = vmatpush1.msra.mxu0 0.0
    %2161 = vmatprep.subr.mxu0 0.0
    %2162 = vmatpush1.msra.mxu0 0.0
    %2163 = vmatprep.subr.mxu0 0.0
    %2164 = vmatpush1.msra.mxu0 0.0
    %2165 = vmatprep.subr.mxu0 0.0
    %2166 = vmatpush1.msra.mxu0 0.0
    %2167 = vmatprep.subr.mxu0 0.0
    %2168 = vmatpush1.msra.mxu0 0.0
    %2169 = vmatprep.subr.mxu0 0.0
    %2170 = vmatpush1.msra.mxu0 0.0
    %2171 = vmatprep.subr.mxu0 0.0
    %2172 = vmatpush1.msra.mxu0 0.0
    %2173 = vmatprep.subr.mxu0 0.0
    %2174 = vmatpush1.msra.mxu0 0.0
    %2175 = vmatprep.subr.mxu0 0.0
    %2176 = vmatpush1.msra.mxu0 0.0
    %2177 = vmatprep.subr.mxu0 0.0
    %2178 = vmatpush1.msra.mxu0 0.0
    %2179 = vmatprep.subr.mxu0 0.0
    %2180 = vmatpush1.msra.mxu0 0.0
    %2181 = vmatprep.subr.mxu0 0.0
    %2182 = vmatpush1.msra.mxu0 0.0
    %2183 = vmatprep.subr.mxu0 0.0
    %2184 = vmatpush1.msra.mxu0 0.0
    %2185 = vmatprep.subr.mxu0 0.0
    %2186 = vmatpush1.msra.mxu0 0.0
    %2187 = vmatprep.subr.mxu0 0.0
    %2188 = vmatpush1.msra.mxu0 0.0
    %2189 = vmatprep.subr.mxu0 0.0
    %2190 = vmatpush1.msra.mxu0 0.0
    %2191 = vmatprep.subr.mxu0 0.0
    %2192 = vmatpush1.msra.mxu0 0.0
    %2193 = vmatprep.subr.mxu0 0.0
    %2194 = vmatpush1.msra.mxu0 0.0
    %2195 = vmatprep.subr.mxu0 0.0
    %2196 = vmatpush1.msra.mxu0 0.0
    %2197 = vmatprep.subr.mxu0 0.0
    %2198 = vmatpush1.msra.mxu0 0.0
    %2199 = vmatprep.mubr.f32.mxu0 0.0
    %2200 = vmatmul.mubr.f32.gmra.mrb[0].mxu0 %v607
    %v2201 = vpop.f32.mrb[0].mxu0
    %v2202 = vadd.f32 0.0, %v2201
    %v2203 = vpop.f32.mrb[0].mxu0
    %v2204 = vadd.f32 0.0, %v2203
    %2205 = vdwg.mxu0
    %v2206 = vstv %s1517
    %v2207 = vmul.f32 %v2206, %v1515
    %v2208 = vmul.f32 %v2206, %v1516
    %v2209 = vstv %s1518
    %v2210 = vmul.f32 %v2209, %v2131
    %v2211 = vmul.f32 %v2209, %v2133
    %v2212 = vmul.f32 %v2209, %v2202
    %v2213 = vmul.f32 %v2209, %v2204
    %v2218 = vcombine.low %v2210, %v2211
    %v2219 = vcombine.low %v2212, %v2213
    %v2222 = vsub.f32 %v2207, %v2218
    %v2223 = vsub.f32 %v2208, %v2219
    %v2224 = vmax.f32 %v2222, -1.0
    %v2225 = vmax.f32 %v2223, -1.0
    %v2226 = vmin.f32 %v2224, 1.0
    %v2227 = vmin.f32 %v2225, 1.0
    %v2228 = vstv %s1519
    %v2229 = vmul.f32 %v2228, %v2226
    %v2230 = vmul.f32 %v2228, %v2227
    %v2231 = vstv %s1520
    %v2232 = vmul.f32 %v2231, %v1515
    %v2233 = vmul.f32 %v2231, %v1516
    %v2234 = vadd.f32 %v2229, %v2232
    %v2235 = vadd.f32 %v2230, %v2233
    %v2236 = vld [vmem:[%s5] sm:$0xff]
    %v2237 = vld [vmem:[%s5 + $0x8] sm:$0xff]
    %v2238 = vstv %s1521
    %v2239 = vmul.f32 %v2238, %v2236
    %v2240 = vmul.f32 %v2238, %v2237
    %v2241 = vadd.f32 %v2234, %v2239
    %v2242 = vadd.f32 %v2235, %v2240
    %v2243 = vmax.f32 %v2241, -1.0
    %v2244 = vmax.f32 %v2242, -1.0
    %v2245 = vmin.f32 %v2243, 1.0
    %v2246 = vmin.f32 %v2244, 1.0
    %2247 = vst [vmem:[%s6] sm:$0xff] %v2245
    %2248 = vst [vmem:[%s6 + $0x8] sm:$0xff] %v2246
    // Predicated region
    $region30: #{_sample.1} parent=1 // pred_check
      _
    $region31: #{_sample.1} parent=1 // pred_check_branch
      %2250 = sbr.rel (0) target = $region33
    $region32: #{_sample.1} parent=1 // pred_region
      _
    $region33: #{_sample.1} parent=1 // pred_fallthru
      _
    // Predicated region
    $region34: #{_sample.1} parent=1 // pred_check
      _
    $region35: #{_sample.1} parent=1 // pred_check_branch
      %2252 = sbr.rel (0) target = $region37
    $region36: #{_sample.1} parent=1 // pred_region
      _
    $region37: #{_sample.1} parent=1 // pred_fallthru
      _
    %2253 = vsyncpa [#allocation3], 1

</llo_original>
